<compile_context>
chip_gen: v5e
topology: v5e:2x2
jax: 0.10.0
libtpu: 0.0.40
codegen_flags: <defaults>
</compile_context>

<pallas_src>
import functools

import jax
import jax.numpy as jnp
from jax.experimental import pallas as pl
from jax.experimental.pallas import tpu as pltpu


def _defect_attention_kernel(q_ref, k_ref,
                             w1_ref, b1_ref, s1_ref, t1_ref,
                             w2_ref, b2_ref, s2_ref, t2_ref,
                             res_ref, attn_ref,
                             amax_ref, kf_ref,
                             *, compute_dtype, n_q, lane_w,
                             approx_rcp, bf16_exp, mask_q):
    qi = pl.program_id(1)
    n_qt = pl.num_programs(1)
    BB, TQ, E = q_ref.shape
    Nk = k_ref.shape[1]
    E2 = w1_ref.shape[1]

    # --- per-batch-block init: cache key-side features, reset running max ---
    @pl.when(qi == 0)
    def _init():
        # One 2D MXU pass over all BB*Nk rows (no broadcasted weight copies).
        k2d = k_ref[...].astype(compute_dtype).reshape(BB * Nk, E)
        kf = jnp.dot(k2d, w2_ref[...], preferred_element_type=jnp.float32)
        kf = jnp.maximum(kf + b2_ref[...], 0.0) * s2_ref[...] + t2_ref[...]
        kf_ref[...] = kf.reshape(BB, Nk, E2).astype(compute_dtype)
        amax_ref[...] = jnp.zeros(amax_ref.shape, amax_ref.dtype)

    # --- query-side features for this q tile (single 2D MXU pass) ---
    q2d = q_ref[...].astype(compute_dtype).reshape(BB * TQ, E)
    qf = jnp.dot(q2d, w1_ref[...], preferred_element_type=jnp.float32)
    qf = jnp.maximum(qf + b1_ref[...], 0.0) * s1_ref[...] + t1_ref[...]
    qf = qf.reshape(BB, TQ, E2).astype(compute_dtype)

    # attn_c = bmm(k_feat, q_feat^T) without materializing a transpose.
    attn = jnp.einsum("bkc,bqc->bkq", kf_ref[...], qf,
                      preferred_element_type=jnp.float32)        # (BB, Nk, TQ)
    attn_ref[...] = attn.astype(attn_ref.dtype)

    # softmax over the Nk axis (dim=-2 of the (B, Nk, Nq) attention matrix).
    m = jnp.max(attn, axis=1, keepdims=True)                     # (BB, 1, TQ)
    if bf16_exp:
        # v6e/v7x: EUP exp in bf16 (~2x); reductions stay in f32.
        e = jnp.exp((attn - m).astype(jnp.bfloat16))
        denom = jnp.sum(e.astype(jnp.float32), axis=1, keepdims=True)
    else:
        e = jnp.exp(attn - m)
        denom = jnp.sum(e, axis=1, keepdims=True)
    # reciprocal + multiply instead of a full-tile divide on both paths.
    inv = pl.reciprocal(denom, approx=approx_rcp)                # (BB, 1, TQ)
    sm = e * inv                                                  # f32

    # Lane-dense running max over the Nq axis: fold the TQ lanes down to
    # lane_w with elementwise VPU maxes; the single cross-lane max happens
    # only in the finalize step.
    def _update(smv):
        acc = smv[:, :, 0:lane_w]
        for j in range(1, TQ // lane_w):
            acc = jnp.maximum(acc, smv[:, :, j * lane_w:(j + 1) * lane_w])
        amax_ref[...] = jnp.maximum(amax_ref[...], acc)

    if mask_q:
        last = n_qt - 1

        @pl.when(qi == last)
        def _ragged():
            # Only the last q tile has padded columns; drop them from the max.
            col = jax.lax.broadcasted_iota(jnp.int32, sm.shape, 2)
            _update(jnp.where(qi * TQ + col < n_q, sm, 0.0))

        @pl.when(qi != last)
        def _full():
            _update(sm)
    else:
        _update(sm)

    # --- finalize: res = max(softmax, -1) * key + key == (amax + 1) * key ---
    @pl.when(qi == n_qt - 1)
    def _finalize():
        a = jnp.max(amax_ref[...], axis=2, keepdims=True)        # (BB, Nk, 1)
        k = k_ref[...].astype(jnp.float32)
        res_ref[...] = ((a + 1.0) * k).astype(res_ref.dtype)


def _vmem_capacity_bytes():
    try:
        cap = int(getattr(pltpu.get_tpu_info(), "vmem_capacity_bytes"))
        if cap > 0:
            return cap
    except Exception:
        pass
    return 64 * 1024 * 1024  # conservative fallback: v7x per-TC VMEM


def _choose_bb(B, Nq, Nk):
    # Fold batches into one block only when per-batch work is tiny, so the
    # 8x128 vreg tiles / MXU rows actually get filled.
    bb_cap = 1
    if max(Nq, Nk) < 128:
        bb_cap = max(1, 256 // max(Nq, Nk, 1))
    if B >= 2:
        # Keep >= 2 batch blocks so the 'parallel' axis can feed both v7x
        # TensorCores (harmless on single-TC v5e/v6e).
        bb_cap = min(bb_cap, max(1, B // 2))
    BB = 1
    for cand in range(min(B, bb_cap), 0, -1):
        if B % cand == 0:
            BB = cand
            break
    return BB


def defect_attention_pallas(query, key, params, *,
                            compute_dtype=None, attn_dtype=None):
    """query: (B, Nq, E), key: (B, Nk, E)  [channel-last layout].

    compute_dtype=jnp.bfloat16 enables the bf16 MXU/EUP fast path (v6e/v7x);
    keep f32 on v5e (no bf16 VPU/EUP).  attn_dtype=jnp.bfloat16 halves the
    dominant (B, Nk, Nq) HBM write when downstream tolerates it.
    """
    B, Nq, E = query.shape
    _, Nk, _ = key.shape
    E2 = 2 * E
    if compute_dtype is None:
        compute_dtype = query.dtype
    compute_dtype = jnp.dtype(compute_dtype)
    if attn_dtype is None:
        attn_dtype = query.dtype
    attn_dtype = jnp.dtype(attn_dtype)

    (w1, b1, s1, t1, w2, b2, s2, t2) = params
    w1c = jnp.asarray(w1, compute_dtype).reshape(E, E2)
    w2c = jnp.asarray(w2, compute_dtype).reshape(E, E2)
    b1f = jnp.asarray(b1, jnp.float32).reshape(1, E2)
    s1f = jnp.asarray(s1, jnp.float32).reshape(1, E2)
    t1f = jnp.asarray(t1, jnp.float32).reshape(1, E2)
    b2f = jnp.asarray(b2, jnp.float32).reshape(1, E2)
    s2f = jnp.asarray(s2, jnp.float32).reshape(1, E2)
    t2f = jnp.asarray(t2, jnp.float32).reshape(1, E2)

    in_sz = jnp.dtype(query.dtype).itemsize
    key_sz = jnp.dtype(key.dtype).itemsize
    attn_sz = attn_dtype.itemsize
    c_sz = compute_dtype.itemsize
    vmem_cap = _vmem_capacity_bytes()

    BB = _choose_bb(B, Nq, Nk)
    n_bb = B // BB

    def _tile_bytes(tq):
        # Per-step resident VMEM: pipelined blocks + params + scratch + f32
        # softmax temporaries (which the old estimate omitted).
        return (2 * BB * tq * E * in_sz             # query blocks (double buf)
                + BB * Nk * E * key_sz              # key block (single buf)
                + 2 * BB * Nk * tq * attn_sz        # attn_c out blocks
                + 2 * BB * Nk * E * key_sz          # res out block
                + 2 * (E * E2 * c_sz + 6 * E2 * 4)  # conv/BN params
                + BB * Nk * E2 * c_sz               # cached key features
                + BB * Nk * 128 * 4                 # lane-dense running max
                + 4 * BB * Nk * tq * 4              # attn/e/sm f32 temporaries
                + 2 * BB * tq * E2 * 4)             # query features

    # q tile: lane dim of the attn_c block, so keep it a multiple of 128 when
    # tiling (lane-dense, unmasked stores); size it from the detected VMEM
    # capacity (64 MiB v7x vs 128 MiB v5e/v6e).
    budget = int(0.4 * vmem_cap)
    if Nq <= 128:
        TQ = Nq
    else:
        nq_pad = ((Nq + 127) // 128) * 128
        cands = sorted({1024, 768, 512, 384, 256, 128, min(nq_pad, 1024)},
                       reverse=True)
        TQ = 128
        for cand in cands:
            if cand <= nq_pad and _tile_bytes(cand) <= budget:
                TQ = cand
                break
    lane_w = TQ if TQ <= 128 else 128
    n_qt = (Nq + TQ - 1) // TQ
    mask_q = (Nq % TQ) != 0

    est = _tile_bytes(TQ)
    vmem_limit = int(min(int(0.8 * vmem_cap), max(32 * 1024 * 1024, 2 * est)))

    is_bf16 = compute_dtype == jnp.dtype(jnp.bfloat16)
    kernel = functools.partial(
        _defect_attention_kernel,
        compute_dtype=compute_dtype, n_q=Nq, lane_w=lane_w,
        approx_rcp=is_bf16, bf16_exp=is_bf16, mask_q=mask_q)

    def build(use_buffered):
        def const_spec(shape, index_map):
            # Grid-invariant blocks: single-buffer them to save VMEM.
            if use_buffered:
                return pl.BlockSpec(shape, index_map,
                                    pipeline_mode=pl.Buffered(1))
            return pl.BlockSpec(shape, index_map)

        mat_spec = const_spec((E, E2), lambda b, q: (0, 0))
        vec_spec = const_spec((1, E2), lambda b, q: (0, 0))
        key_spec = const_spec((BB, Nk, E), lambda b, q: (b, 0, 0))

        return pl.pallas_call(
            kernel,
            out_shape=(
                jax.ShapeDtypeStruct((B, Nk, E), key.dtype),      # res
                jax.ShapeDtypeStruct((B, Nk, Nq), attn_dtype),    # attn_c
            ),
            grid=(n_bb, n_qt),
            in_specs=[
                pl.BlockSpec((BB, TQ, E), lambda b, q: (b, q, 0)),  # query
                key_spec,                                           # key
                mat_spec, vec_spec, vec_spec, vec_spec,             # layer1
                mat_spec, vec_spec, vec_spec, vec_spec,             # layer2
            ],
            out_specs=(
                pl.BlockSpec((BB, Nk, E), lambda b, q: (b, 0, 0)),   # res
                pl.BlockSpec((BB, Nk, TQ), lambda b, q: (b, 0, q)),  # attn_c
            ),
            scratch_shapes=[
                pltpu.VMEM((BB, Nk, lane_w), jnp.float32),  # running max
                pltpu.VMEM((BB, Nk, E2), compute_dtype),    # cached key feats
            ],
            compiler_params=pltpu.CompilerParams(
                dimension_semantics=("parallel", "arbitrary"),
                vmem_limit_bytes=vmem_limit),
        )

    args = (query, key, w1c, b1f, s1f, t1f, w2c, b2f, s2f, t2f)
    try:
        return build(True)(*args)
    except Exception:
        # Fallback for Pallas versions without BlockSpec(pipeline_mode=...).
        return build(False)(*args)


def make_params(key_rng, emb_dim):
    """Synthetic params mirroring the PyTorch module shapes.

    Conv1d(E, 2E, 1): weight (2E, E, 1) stored as an (E, 2E) matmul weight,
    bias (2E,).  BatchNorm1d(2E) in eval mode is a per-channel affine:
    scale = gamma / sqrt(running_var + eps), shift = beta - running_mean * scale.
    """
    E, E2 = emb_dim, 2 * emb_dim
    ks = jax.random.split(key_rng, 8)
    w1 = jax.random.normal(ks[0], (E, E2), jnp.float32) * 0.1
    b1 = jax.random.normal(ks[1], (1, E2), jnp.float32) * 0.1
    w2 = jax.random.normal(ks[2], (E, E2), jnp.float32) * 0.1
    b2 = jax.random.normal(ks[3], (1, E2), jnp.float32) * 0.1
    s1 = 1.0 + 0.3 * jax.random.normal(ks[4], (1, E2), jnp.float32)
    t1 = 0.1 * jax.random.normal(ks[5], (1, E2), jnp.float32)
    s2 = 1.0 + 0.3 * jax.random.normal(ks[6], (1, E2), jnp.float32)
    t2 = 0.1 * jax.random.normal(ks[7], (1, E2), jnp.float32)
    return (w1, b1, s1, t1, w2, b2, s2, t2)


def reference_jax(query, key, params):
    (w1, b1, s1, t1, w2, b2, s2, t2) = params
    qf = jnp.maximum(query @ w1 + b1, 0.0) * s1 + t1        # (B, Nq, 2E)
    kf = jnp.maximum(key @ w2 + b2, 0.0) * s2 + t2          # (B, Nk, 2E)
    attn_c = jnp.einsum("bkc,bqc->bkq", kf, qf)             # (B, Nk, Nq)
    sm = jax.nn.softmax(attn_c, axis=-2)
    a = jnp.max(sm, axis=-1, keepdims=True)                 # (B, Nk, 1)
    res = a * key + key
    return res, attn_c


if __name__ == "__main__":
    rng = jax.random.PRNGKey(0)
    kq, kk, kp, kq2, kk2 = jax.random.split(rng, 5)

    # Case 1: tiny shapes (single q tile).
    B, Nq, Nk, E = 2, 8, 8, 32
    query = jax.random.normal(kq, (B, Nq, E), jnp.float32)
    key = jax.random.normal(kk, (B, Nk, E), jnp.float32)
    params = make_params(kp, E)
    res_ref, attn_ref = reference_jax(query, key, params)

    res, attn_c = defect_attention_pallas(query, key, params)   # exact f32 path
    jax.block_until_ready((res, attn_c))
    assert res.shape == (B, Nk, E) and attn_c.shape == (B, Nk, Nq)
    assert jnp.allclose(attn_c, attn_ref, atol=1e-4, rtol=1e-4)
    assert jnp.allclose(res, res_ref, atol=1e-4, rtol=1e-4)

    # bf16 MXU/EUP fast path (v6e/v7x): bf16 operands + bf16 exp, f32 accum.
    res_bf, attn_bf = defect_attention_pallas(query, key, params,
                                              compute_dtype=jnp.bfloat16)
    jax.block_until_ready((res_bf, attn_bf))
    assert jnp.allclose(attn_bf, attn_ref, atol=1e-1, rtol=1e-1)
    assert jnp.allclose(res_bf, res_ref, atol=1e-1, rtol=1e-1)

    # Case 2: multiple q tiles with a ragged last tile (exercises the running
    # max accumulator and the masked last-tile path).
    B2, Nq2, Nk2, Em2 = 2, 1300, 24, 16
    query2 = jax.random.normal(kq2, (B2, Nq2, Em2), jnp.float32)
    key2 = jax.random.normal(kk2, (B2, Nk2, Em2), jnp.float32)
    params2 = make_params(kp, Em2)
    res2_ref, attn2_ref = reference_jax(query2, key2, params2)
    res2, attn2 = defect_attention_pallas(query2, key2, params2)
    jax.block_until_ready((res2, attn2))
    assert jnp.allclose(attn2, attn2_ref, atol=1e-4, rtol=1e-4)
    assert jnp.allclose(res2, res2_ref, atol=1e-4, rtol=1e-4)

    print("KERNEL_OK")
</pallas_src>

<mosaic_0001>
module attributes {stable_mosaic.version = 11 : i64} {
  func.func @_defect_attention_kernel(%arg0: i32, %arg1: i32, %arg2: memref<1x8x32xf32, #tpu.memory_space<vmem>>, %arg3: memref<1x8x32xf32, #tpu.memory_space<vmem>>, %arg4: memref<32x64xf32, #tpu.memory_space<vmem>>, %arg5: memref<1x64xf32, #tpu.memory_space<vmem>>, %arg6: memref<1x64xf32, #tpu.memory_space<vmem>>, %arg7: memref<1x64xf32, #tpu.memory_space<vmem>>, %arg8: memref<32x64xf32, #tpu.memory_space<vmem>>, %arg9: memref<1x64xf32, #tpu.memory_space<vmem>>, %arg10: memref<1x64xf32, #tpu.memory_space<vmem>>, %arg11: memref<1x64xf32, #tpu.memory_space<vmem>>, %arg12: memref<1x8x32xf32, #tpu.memory_space<vmem>>, %arg13: memref<1x8x8xf32, #tpu.memory_space<vmem>>, %arg14: memref<1x8x8xf32, #tpu.memory_space<vmem>>, %arg15: memref<1x8x64xf32, #tpu.memory_space<vmem>>) attributes {dimension_semantics = [#tpu.dimension_semantics<parallel>, #tpu.dimension_semantics<arbitrary>], iteration_bounds = array<i64: 2, 1>, scalar_prefetch = 0 : i64, scratch_operands = 2 : i64, tpu.core_type = #tpu.core_type<tc>, window_params = [{transform_indices = @transform_0, window_bounds = array<i64: 1, 8, 32>}, {pipeline_mode = #tpu.pipeline_mode<synchronous>, transform_indices = @transform_1, window_bounds = array<i64: 1, 8, 32>}, {pipeline_mode = #tpu.pipeline_mode<synchronous>, transform_indices = @transform_2, window_bounds = array<i64: 32, 64>}, {pipeline_mode = #tpu.pipeline_mode<synchronous>, transform_indices = @transform_3, window_bounds = array<i64: 1, 64>}, {pipeline_mode = #tpu.pipeline_mode<synchronous>, transform_indices = @transform_4, window_bounds = array<i64: 1, 64>}, {pipeline_mode = #tpu.pipeline_mode<synchronous>, transform_indices = @transform_5, window_bounds = array<i64: 1, 64>}, {pipeline_mode = #tpu.pipeline_mode<synchronous>, transform_indices = @transform_6, window_bounds = array<i64: 32, 64>}, {pipeline_mode = #tpu.pipeline_mode<synchronous>, transform_indices = @transform_7, window_bounds = array<i64: 1, 64>}, {pipeline_mode = #tpu.pipeline_mode<synchronous>, transform_indices = @transform_8, window_bounds = array<i64: 1, 64>}, {pipeline_mode = #tpu.pipeline_mode<synchronous>, transform_indices = @transform_9, window_bounds = array<i64: 1, 64>}, {transform_indices = @transform_10, window_bounds = array<i64: 1, 8, 32>}, {transform_indices = @transform_11, window_bounds = array<i64: 1, 8, 8>}]} {
    %c0_i32 = arith.constant 0 : i32
    %0 = arith.cmpi eq, %arg1, %c0_i32 : i32
    %1 = arith.extui %0 : i1 to i32
    %c0_i32_0 = arith.constant 0 : i32
    %2 = arith.cmpi ne, %1, %c0_i32_0 : i32
    scf.if %2 {
      %c0_29 = arith.constant 0 : index
      %c0_30 = arith.constant 0 : index
      %c0_31 = arith.constant 0 : index
      %38 = vector.load %arg3[%c0_29, %c0_30, %c0_31] : memref<1x8x32xf32, #tpu.memory_space<vmem>>, vector<1x8x32xf32>
      %39 = vector.shape_cast %38 : vector<1x8x32xf32> to vector<8x32xf32>
      %c0_32 = arith.constant 0 : index
      %c0_33 = arith.constant 0 : index
      %40 = vector.load %arg8[%c0_32, %c0_33] : memref<32x64xf32, #tpu.memory_space<vmem>>, vector<32x64xf32>
      %cst_34 = arith.constant dense<0.000000e+00> : vector<8x64xf32>
      %41 = tpu.matmul %39, %40, %cst_34 {dimension_numbers = #tpu.dot_dimension_numbers<[1], [0], [0], [1], [0, 0, 1, 1], [], []>} : vector<8x32xf32>, vector<32x64xf32>, vector<8x64xf32> -> vector<8x64xf32>
      %c0_35 = arith.constant 0 : index
      %c0_36 = arith.constant 0 : index
      %42 = vector.load %arg9[%c0_35, %c0_36] : memref<1x64xf32, #tpu.memory_space<vmem>>, vector<1x64xf32>
      %43 = vector.broadcast %42 : vector<1x64xf32> to vector<8x64xf32>
      %44 = arith.addf %41, %43 : vector<8x64xf32>
      %cst_37 = arith.constant 0.000000e+00 : f32
      %45 = vector.broadcast %cst_37 : f32 to vector<8x64xf32>
      %46 = arith.maximumf %44, %45 : vector<8x64xf32>
      %c0_38 = arith.constant 0 : index
      %c0_39 = arith.constant 0 : index
      %47 = vector.load %arg10[%c0_38, %c0_39] : memref<1x64xf32, #tpu.memory_space<vmem>>, vector<1x64xf32>
      %48 = vector.broadcast %47 : vector<1x64xf32> to vector<8x64xf32>
      %49 = arith.mulf %46, %48 : vector<8x64xf32>
      %c0_40 = arith.constant 0 : index
      %c0_41 = arith.constant 0 : index
      %50 = vector.load %arg11[%c0_40, %c0_41] : memref<1x64xf32, #tpu.memory_space<vmem>>, vector<1x64xf32>
      %51 = vector.broadcast %50 : vector<1x64xf32> to vector<8x64xf32>
      %52 = arith.addf %49, %51 : vector<8x64xf32>
      %53 = vector.shape_cast %52 : vector<8x64xf32> to vector<1x8x64xf32>
      %c0_42 = arith.constant 0 : index
      %c0_43 = arith.constant 0 : index
      %c0_44 = arith.constant 0 : index
      %54 = vector.load %arg15[%c0_42, %c0_43, %c0_44] : memref<1x8x64xf32, #tpu.memory_space<vmem>>, vector<1x8x64xf32>
      tpu.vector_store %arg15[%c0_42, %c0_43, %c0_44], %53 {strides = array<i32>} : memref<1x8x64xf32, #tpu.memory_space<vmem>>, vector<1x8x64xf32>,
      %cst_45 = arith.constant 0.000000e+00 : f32
      %55 = vector.broadcast %cst_45 : f32 to vector<1x8x8xf32>
      %c0_46 = arith.constant 0 : index
      %c0_47 = arith.constant 0 : index
      %c0_48 = arith.constant 0 : index
      %56 = vector.load %arg14[%c0_46, %c0_47, %c0_48] : memref<1x8x8xf32, #tpu.memory_space<vmem>>, vector<1x8x8xf32>
      tpu.vector_store %arg14[%c0_46, %c0_47, %c0_48], %55 {strides = array<i32>} : memref<1x8x8xf32, #tpu.memory_space<vmem>>, vector<1x8x8xf32>,
    } else {
    }
    %c0 = arith.constant 0 : index
    %c0_1 = arith.constant 0 : index
    %c0_2 = arith.constant 0 : index
    %3 = vector.load %arg2[%c0, %c0_1, %c0_2] : memref<1x8x32xf32, #tpu.memory_space<vmem>>, vector<1x8x32xf32>
    %4 = vector.shape_cast %3 : vector<1x8x32xf32> to vector<8x32xf32>
    %c0_3 = arith.constant 0 : index
    %c0_4 = arith.constant 0 : index
    %5 = vector.load %arg4[%c0_3, %c0_4] : memref<32x64xf32, #tpu.memory_space<vmem>>, vector<32x64xf32>
    %cst = arith.constant dense<0.000000e+00> : vector<8x64xf32>
    %6 = tpu.matmul %4, %5, %cst {dimension_numbers = #tpu.dot_dimension_numbers<[1], [0], [0], [1], [0, 0, 1, 1], [], []>} : vector<8x32xf32>, vector<32x64xf32>, vector<8x64xf32> -> vector<8x64xf32>
    %c0_5 = arith.constant 0 : index
    %c0_6 = arith.constant 0 : index
    %7 = vector.load %arg5[%c0_5, %c0_6] : memref<1x64xf32, #tpu.memory_space<vmem>>, vector<1x64xf32>
    %8 = vector.broadcast %7 : vector<1x64xf32> to vector<8x64xf32>
    %9 = arith.addf %6, %8 : vector<8x64xf32>
    %cst_7 = arith.constant 0.000000e+00 : f32
    %10 = vector.broadcast %cst_7 : f32 to vector<8x64xf32>
    %11 = arith.maximumf %9, %10 : vector<8x64xf32>
    %c0_8 = arith.constant 0 : index
    %c0_9 = arith.constant 0 : index
    %12 = vector.load %arg6[%c0_8, %c0_9] : memref<1x64xf32, #tpu.memory_space<vmem>>, vector<1x64xf32>
    %13 = vector.broadcast %12 : vector<1x64xf32> to vector<8x64xf32>
    %14 = arith.mulf %11, %13 : vector<8x64xf32>
    %c0_10 = arith.constant 0 : index
    %c0_11 = arith.constant 0 : index
    %15 = vector.load %arg7[%c0_10, %c0_11] : memref<1x64xf32, #tpu.memory_space<vmem>>, vector<1x64xf32>
    %16 = vector.broadcast %15 : vector<1x64xf32> to vector<8x64xf32>
    %17 = arith.addf %14, %16 : vector<8x64xf32>
    %18 = vector.shape_cast %17 : vector<8x64xf32> to vector<1x8x64xf32>
    %c0_12 = arith.constant 0 : index
    %c0_13 = arith.constant 0 : index
    %c0_14 = arith.constant 0 : index
    %19 = vector.load %arg15[%c0_12, %c0_13, %c0_14] : memref<1x8x64xf32, #tpu.memory_space<vmem>>, vector<1x8x64xf32>
    "tpu.trace_start"() <{level = 10 : i32, message = "bkc,bqc->bkq"}> : () -> ()
    %cst_15 = arith.constant dense<0.000000e+00> : vector<1x8x8xf32>
    %20 = tpu.matmul %19, %18, %cst_15 {dimension_numbers = #tpu.dot_dimension_numbers<[2], [2], [1], [1], [0, 0, 0, 1, 1, 1], [0], [0]>} : vector<1x8x64xf32>, vector<1x8x64xf32>, vector<1x8x8xf32> -> vector<1x8x8xf32>
    "tpu.trace_stop"() : () -> ()
    %c0_16 = arith.constant 0 : index
    %c0_17 = arith.constant 0 : index
    %c0_18 = arith.constant 0 : index
    %21 = vector.load %arg13[%c0_16, %c0_17, %c0_18] : memref<1x8x8xf32, #tpu.memory_space<vmem>>, vector<1x8x8xf32>
    tpu.vector_store %arg13[%c0_16, %c0_17, %c0_18], %20 {strides = array<i32>} : memref<1x8x8xf32, #tpu.memory_space<vmem>>, vector<1x8x8xf32>,
    %cst_19 = arith.constant dense<0xFF800000> : vector<1x8xf32>
    %22 = vector.multi_reduction <maximumf>, %20, %cst_19 [1] : vector<1x8x8xf32> to vector<1x8xf32>
    %23 = vector.shape_cast %22 : vector<1x8xf32> to vector<1x1x8xf32>
    %24 = vector.broadcast %23 : vector<1x1x8xf32> to vector<1x8x8xf32>
    %25 = arith.subf %20, %24 : vector<1x8x8xf32>
    %26 = math.exp %25 : vector<1x8x8xf32>
    %cst_20 = arith.constant dense<0.000000e+00> : vector<1x8xf32>
    %27 = vector.multi_reduction <add>, %26, %cst_20 [1] : vector<1x8x8xf32> to vector<1x8xf32>
    %28 = vector.shape_cast %27 : vector<1x8xf32> to vector<1x1x8xf32>
    %29 = tpu.reciprocal %28 : vector<1x1x8xf32> -> vector<1x1x8xf32>
    %30 = vector.broadcast %29 : vector<1x1x8xf32> to vector<1x8x8xf32>
    %31 = arith.mulf %26, %30 : vector<1x8x8xf32>
    %c0_21 = arith.constant 0 : index
    %c0_22 = arith.constant 0 : index
    %c0_23 = arith.constant 0 : index
    %32 = vector.load %arg14[%c0_21, %c0_22, %c0_23] : memref<1x8x8xf32, #tpu.memory_space<vmem>>, vector<1x8x8xf32>
    %33 = arith.maximumf %32, %31 : vector<1x8x8xf32>
    %c0_24 = arith.constant 0 : index
    %c0_25 = arith.constant 0 : index
    %c0_26 = arith.constant 0 : index
    %34 = vector.load %arg14[%c0_24, %c0_25, %c0_26] : memref<1x8x8xf32, #tpu.memory_space<vmem>>, vector<1x8x8xf32>
    tpu.vector_store %arg14[%c0_24, %c0_25, %c0_26], %33 {strides = array<i32>} : memref<1x8x8xf32, #tpu.memory_space<vmem>>, vector<1x8x8xf32>,
    %c0_i32_27 = arith.constant 0 : i32
    %35 = arith.cmpi eq, %arg1, %c0_i32_27 : i32
    %36 = arith.extui %35 : i1 to i32
    %c0_i32_28 = arith.constant 0 : i32
    %37 = arith.cmpi ne, %36, %c0_i32_28 : i32
    scf.if %37 {
      %c0_29 = arith.constant 0 : index
      %c0_30 = arith.constant 0 : index
      %c0_31 = arith.constant 0 : index
      %38 = vector.load %arg14[%c0_29, %c0_30, %c0_31] : memref<1x8x8xf32, #tpu.memory_space<vmem>>, vector<1x8x8xf32>
      %cst_32 = arith.constant dense<0xFF800000> : vector<1x8xf32>
      %39 = vector.multi_reduction <maximumf>, %38, %cst_32 [2] : vector<1x8x8xf32> to vector<1x8xf32>
      %40 = vector.shape_cast %39 : vector<1x8xf32> to vector<1x8x1xf32>
      %c0_33 = arith.constant 0 : index
      %c0_34 = arith.constant 0 : index
      %c0_35 = arith.constant 0 : index
      %41 = vector.load %arg3[%c0_33, %c0_34, %c0_35] : memref<1x8x32xf32, #tpu.memory_space<vmem>>, vector<1x8x32xf32>
      %cst_36 = arith.constant 1.000000e+00 : f32
      %42 = vector.broadcast %cst_36 : f32 to vector<1x8x1xf32>
      %43 = arith.addf %40, %42 : vector<1x8x1xf32>
      %44 = vector.broadcast %43 : vector<1x8x1xf32> to vector<1x8x32xf32>
      %45 = arith.mulf %44, %41 : vector<1x8x32xf32>
      %c0_37 = arith.constant 0 : index
      %c0_38 = arith.constant 0 : index
      %c0_39 = arith.constant 0 : index
      %46 = vector.load %arg12[%c0_37, %c0_38, %c0_39] : memref<1x8x32xf32, #tpu.memory_space<vmem>>, vector<1x8x32xf32>
      tpu.vector_store %arg12[%c0_37, %c0_38, %c0_39], %45 {strides = array<i32>} : memref<1x8x32xf32, #tpu.memory_space<vmem>>, vector<1x8x32xf32>,
    } else {
    }
    return
  }
  func.func @transform_0(%arg0: i32, %arg1: i32) -> (i32, i32, i32) {
    %c0_i32 = arith.constant 0 : i32
    %c0_i32_0 = arith.constant 0 : i32
    return %arg0, %arg1, %c0_i32 : i32, i32, i32
  }
  func.func @transform_1(%arg0: i32, %arg1: i32) -> (i32, i32, i32) {
    %c0_i32 = arith.constant 0 : i32
    %c0_i32_0 = arith.constant 0 : i32
    %c0_i32_1 = arith.constant 0 : i32
    return %arg0, %c0_i32, %c0_i32_0 : i32, i32, i32
  }
  func.func @transform_2(%arg0: i32, %arg1: i32) -> (i32, i32) {
    %c0_i32 = arith.constant 0 : i32
    %c0_i32_0 = arith.constant 0 : i32
    %c0_i32_1 = arith.constant 0 : i32
    return %c0_i32, %c0_i32_0 : i32, i32
  }
  func.func @transform_3(%arg0: i32, %arg1: i32) -> (i32, i32) {
    %c0_i32 = arith.constant 0 : i32
    %c0_i32_0 = arith.constant 0 : i32
    %c0_i32_1 = arith.constant 0 : i32
    return %c0_i32, %c0_i32_0 : i32, i32
  }
  func.func @transform_4(%arg0: i32, %arg1: i32) -> (i32, i32) {
    %c0_i32 = arith.constant 0 : i32
    %c0_i32_0 = arith.constant 0 : i32
    %c0_i32_1 = arith.constant 0 : i32
    return %c0_i32, %c0_i32_0 : i32, i32
  }
  func.func @transform_5(%arg0: i32, %arg1: i32) -> (i32, i32) {
    %c0_i32 = arith.constant 0 : i32
    %c0_i32_0 = arith.constant 0 : i32
    %c0_i32_1 = arith.constant 0 : i32
    return %c0_i32, %c0_i32_0 : i32, i32
  }
  func.func @transform_6(%arg0: i32, %arg1: i32) -> (i32, i32) {
    %c0_i32 = arith.constant 0 : i32
    %c0_i32_0 = arith.constant 0 : i32
    %c0_i32_1 = arith.constant 0 : i32
    return %c0_i32, %c0_i32_0 : i32, i32
  }
  func.func @transform_7(%arg0: i32, %arg1: i32) -> (i32, i32) {
    %c0_i32 = arith.constant 0 : i32
    %c0_i32_0 = arith.constant 0 : i32
    %c0_i32_1 = arith.constant 0 : i32
    return %c0_i32, %c0_i32_0 : i32, i32
  }
  func.func @transform_8(%arg0: i32, %arg1: i32) -> (i32, i32) {
    %c0_i32 = arith.constant 0 : i32
    %c0_i32_0 = arith.constant 0 : i32
    %c0_i32_1 = arith.constant 0 : i32
    return %c0_i32, %c0_i32_0 : i32, i32
  }
  func.func @transform_9(%arg0: i32, %arg1: i32) -> (i32, i32) {
    %c0_i32 = arith.constant 0 : i32
    %c0_i32_0 = arith.constant 0 : i32
    %c0_i32_1 = arith.constant 0 : i32
    return %c0_i32, %c0_i32_0 : i32, i32
  }
  func.func @transform_10(%arg0: i32, %arg1: i32) -> (i32, i32, i32) {
    %c0_i32 = arith.constant 0 : i32
    %c0_i32_0 = arith.constant 0 : i32
    %c0_i32_1 = arith.constant 0 : i32
    return %arg0, %c0_i32, %c0_i32_0 : i32, i32, i32
  }
  func.func @transform_11(%arg0: i32, %arg1: i32) -> (i32, i32, i32) {
    %c0_i32 = arith.constant 0 : i32
    %c0_i32_0 = arith.constant 0 : i32
    return %arg0, %c0_i32, %arg1 : i32, i32, i32
  }
}

module attributes {stable_mosaic.version = 11 : i64} {
  func.func @_defect_attention_kernel(%arg0: i32, %arg1: i32, %arg2: memref<1x8x32xf32, #tpu.memory_space<vmem>>, %arg3: memref<1x8x32xf32, #tpu.memory_space<vmem>>, %arg4: memref<32x64xf32, #tpu.memory_space<vmem>>, %arg5: memref<1x64xf32, #tpu.memory_space<vmem>>, %arg6: memref<1x64xf32, #tpu.memory_space<vmem>>, %arg7: memref<1x64xf32, #tpu.memory_space<vmem>>, %arg8: memref<32x64xf32, #tpu.memory_space<vmem>>, %arg9: memref<1x64xf32, #tpu.memory_space<vmem>>, %arg10: memref<1x64xf32, #tpu.memory_space<vmem>>, %arg11: memref<1x64xf32, #tpu.memory_space<vmem>>, %arg12: memref<1x8x32xf32, #tpu.memory_space<vmem>>, %arg13: memref<1x8x8xf32, #tpu.memory_space<vmem>>, %arg14: memref<1x8x8xf32, #tpu.memory_space<vmem>>, %arg15: memref<1x8x64xf32, #tpu.memory_space<vmem>>) attributes {dimension_semantics = [#tpu.dimension_semantics<parallel>, #tpu.dimension_semantics<arbitrary>], iteration_bounds = array<i64: 2, 1>, scalar_prefetch = 0 : i64, scratch_operands = 2 : i64, tpu.core_type = #tpu.core_type<tc>, window_params = [{transform_indices = @transform_0, window_bounds = array<i64: 1, 8, 32>}, {transform_indices = @transform_1, window_bounds = array<i64: 1, 8, 32>}, {pipeline_mode = #tpu.pipeline_mode<synchronous>, transform_indices = @transform_2, window_bounds = array<i64: 32, 64>}, {pipeline_mode = #tpu.pipeline_mode<synchronous>, transform_indices = @transform_3, window_bounds = array<i64: 1, 64>}, {pipeline_mode = #tpu.pipeline_mode<synchronous>, transform_indices = @transform_4, window_bounds = array<i64: 1, 64>}, {pipeline_mode = #tpu.pipeline_mode<synchronous>, transform_indices = @transform_5, window_bounds = array<i64: 1, 64>}, {pipeline_mode = #tpu.pipeline_mode<synchronous>, transform_indices = @transform_6, window_bounds = array<i64: 32, 64>}, {pipeline_mode = #tpu.pipeline_mode<synchronous>, transform_indices = @transform_7, window_bounds = array<i64: 1, 64>}, {pipeline_mode = #tpu.pipeline_mode<synchronous>, transform_indices = @transform_8, window_bounds = array<i64: 1, 64>}, {pipeline_mode = #tpu.pipeline_mode<synchronous>, transform_indices = @transform_9, window_bounds = array<i64: 1, 64>}, {transform_indices = @transform_10, window_bounds = array<i64: 1, 8, 32>}, {transform_indices = @transform_11, window_bounds = array<i64: 1, 8, 8>}]} {
    %c0_i32 = arith.constant 0 : i32
    %0 = arith.cmpi eq, %arg1, %c0_i32 : i32
    %1 = arith.extui %0 : i1 to i32
    %c0_i32_0 = arith.constant 0 : i32
    %2 = arith.cmpi ne, %1, %c0_i32_0 : i32
    scf.if %2 {
      %c0_29 = arith.constant 0 : index
      %c0_30 = arith.constant 0 : index
      %c0_31 = arith.constant 0 : index
      %38 = vector.load %arg3[%c0_29, %c0_30, %c0_31] : memref<1x8x32xf32, #tpu.memory_space<vmem>>, vector<1x8x32xf32>
      %39 = vector.shape_cast %38 : vector<1x8x32xf32> to vector<8x32xf32>
      %c0_32 = arith.constant 0 : index
      %c0_33 = arith.constant 0 : index
      %40 = vector.load %arg8[%c0_32, %c0_33] : memref<32x64xf32, #tpu.memory_space<vmem>>, vector<32x64xf32>
      %cst_34 = arith.constant dense<0.000000e+00> : vector<8x64xf32>
      %41 = tpu.matmul %39, %40, %cst_34 {dimension_numbers = #tpu.dot_dimension_numbers<[1], [0], [0], [1], [0, 0, 1, 1], [], []>} : vector<8x32xf32>, vector<32x64xf32>, vector<8x64xf32> -> vector<8x64xf32>
      %c0_35 = arith.constant 0 : index
      %c0_36 = arith.constant 0 : index
      %42 = vector.load %arg9[%c0_35, %c0_36] : memref<1x64xf32, #tpu.memory_space<vmem>>, vector<1x64xf32>
      %43 = vector.broadcast %42 : vector<1x64xf32> to vector<8x64xf32>
      %44 = arith.addf %41, %43 : vector<8x64xf32>
      %cst_37 = arith.constant 0.000000e+00 : f32
      %45 = vector.broadcast %cst_37 : f32 to vector<8x64xf32>
      %46 = arith.maximumf %44, %45 : vector<8x64xf32>
      %c0_38 = arith.constant 0 : index
      %c0_39 = arith.constant 0 : index
      %47 = vector.load %arg10[%c0_38, %c0_39] : memref<1x64xf32, #tpu.memory_space<vmem>>, vector<1x64xf32>
      %48 = vector.broadcast %47 : vector<1x64xf32> to vector<8x64xf32>
      %49 = arith.mulf %46, %48 : vector<8x64xf32>
      %c0_40 = arith.constant 0 : index
      %c0_41 = arith.constant 0 : index
      %50 = vector.load %arg11[%c0_40, %c0_41] : memref<1x64xf32, #tpu.memory_space<vmem>>, vector<1x64xf32>
      %51 = vector.broadcast %50 : vector<1x64xf32> to vector<8x64xf32>
      %52 = arith.addf %49, %51 : vector<8x64xf32>
      %53 = vector.shape_cast %52 : vector<8x64xf32> to vector<1x8x64xf32>
      %c0_42 = arith.constant 0 : index
      %c0_43 = arith.constant 0 : index
      %c0_44 = arith.constant 0 : index
      %54 = vector.load %arg15[%c0_42, %c0_43, %c0_44] : memref<1x8x64xf32, #tpu.memory_space<vmem>>, vector<1x8x64xf32>
      tpu.vector_store %arg15[%c0_42, %c0_43, %c0_44], %53 {strides = array<i32>} : memref<1x8x64xf32, #tpu.memory_space<vmem>>, vector<1x8x64xf32>,
      %cst_45 = arith.constant 0.000000e+00 : f32
      %55 = vector.broadcast %cst_45 : f32 to vector<1x8x8xf32>
      %c0_46 = arith.constant 0 : index
      %c0_47 = arith.constant 0 : index
      %c0_48 = arith.constant 0 : index
      %56 = vector.load %arg14[%c0_46, %c0_47, %c0_48] : memref<1x8x8xf32, #tpu.memory_space<vmem>>, vector<1x8x8xf32>
      tpu.vector_store %arg14[%c0_46, %c0_47, %c0_48], %55 {strides = array<i32>} : memref<1x8x8xf32, #tpu.memory_space<vmem>>, vector<1x8x8xf32>,
    } else {
    }
    %c0 = arith.constant 0 : index
    %c0_1 = arith.constant 0 : index
    %c0_2 = arith.constant 0 : index
    %3 = vector.load %arg2[%c0, %c0_1, %c0_2] : memref<1x8x32xf32, #tpu.memory_space<vmem>>, vector<1x8x32xf32>
    %4 = vector.shape_cast %3 : vector<1x8x32xf32> to vector<8x32xf32>
    %c0_3 = arith.constant 0 : index
    %c0_4 = arith.constant 0 : index
    %5 = vector.load %arg4[%c0_3, %c0_4] : memref<32x64xf32, #tpu.memory_space<vmem>>, vector<32x64xf32>
    %cst = arith.constant dense<0.000000e+00> : vector<8x64xf32>
    %6 = tpu.matmul %4, %5, %cst {dimension_numbers = #tpu.dot_dimension_numbers<[1], [0], [0], [1], [0, 0, 1, 1], [], []>} : vector<8x32xf32>, vector<32x64xf32>, vector<8x64xf32> -> vector<8x64xf32>
    %c0_5 = arith.constant 0 : index
    %c0_6 = arith.constant 0 : index
    %7 = vector.load %arg5[%c0_5, %c0_6] : memref<1x64xf32, #tpu.memory_space<vmem>>, vector<1x64xf32>
    %8 = vector.broadcast %7 : vector<1x64xf32> to vector<8x64xf32>
    %9 = arith.addf %6, %8 : vector<8x64xf32>
    %cst_7 = arith.constant 0.000000e+00 : f32
    %10 = vector.broadcast %cst_7 : f32 to vector<8x64xf32>
    %11 = arith.maximumf %9, %10 : vector<8x64xf32>
    %c0_8 = arith.constant 0 : index
    %c0_9 = arith.constant 0 : index
    %12 = vector.load %arg6[%c0_8, %c0_9] : memref<1x64xf32, #tpu.memory_space<vmem>>, vector<1x64xf32>
    %13 = vector.broadcast %12 : vector<1x64xf32> to vector<8x64xf32>
    %14 = arith.mulf %11, %13 : vector<8x64xf32>
    %c0_10 = arith.constant 0 : index
    %c0_11 = arith.constant 0 : index
    %15 = vector.load %arg7[%c0_10, %c0_11] : memref<1x64xf32, #tpu.memory_space<vmem>>, vector<1x64xf32>
    %16 = vector.broadcast %15 : vector<1x64xf32> to vector<8x64xf32>
    %17 = arith.addf %14, %16 : vector<8x64xf32>
    %18 = vector.shape_cast %17 : vector<8x64xf32> to vector<1x8x64xf32>
    %c0_12 = arith.constant 0 : index
    %c0_13 = arith.constant 0 : index
    %c0_14 = arith.constant 0 : index
    %19 = vector.load %arg15[%c0_12, %c0_13, %c0_14] : memref<1x8x64xf32, #tpu.memory_space<vmem>>, vector<1x8x64xf32>
    "tpu.trace_start"() <{level = 10 : i32, message = "bkc,bqc->bkq"}> : () -> ()
    %cst_15 = arith.constant dense<0.000000e+00> : vector<1x8x8xf32>
    %20 = tpu.matmul %19, %18, %cst_15 {dimension_numbers = #tpu.dot_dimension_numbers<[2], [2], [1], [1], [0, 0, 0, 1, 1, 1], [0], [0]>} : vector<1x8x64xf32>, vector<1x8x64xf32>, vector<1x8x8xf32> -> vector<1x8x8xf32>
    "tpu.trace_stop"() : () -> ()
    %c0_16 = arith.constant 0 : index
    %c0_17 = arith.constant 0 : index
    %c0_18 = arith.constant 0 : index
    %21 = vector.load %arg13[%c0_16, %c0_17, %c0_18] : memref<1x8x8xf32, #tpu.memory_space<vmem>>, vector<1x8x8xf32>
    tpu.vector_store %arg13[%c0_16, %c0_17, %c0_18], %20 {strides = array<i32>} : memref<1x8x8xf32, #tpu.memory_space<vmem>>, vector<1x8x8xf32>,
    %cst_19 = arith.constant dense<0xFF800000> : vector<1x8xf32>
    %22 = vector.multi_reduction <maximumf>, %20, %cst_19 [1] : vector<1x8x8xf32> to vector<1x8xf32>
    %23 = vector.shape_cast %22 : vector<1x8xf32> to vector<1x1x8xf32>
    %24 = vector.broadcast %23 : vector<1x1x8xf32> to vector<1x8x8xf32>
    %25 = arith.subf %20, %24 : vector<1x8x8xf32>
    %26 = math.exp %25 : vector<1x8x8xf32>
    %cst_20 = arith.constant dense<0.000000e+00> : vector<1x8xf32>
    %27 = vector.multi_reduction <add>, %26, %cst_20 [1] : vector<1x8x8xf32> to vector<1x8xf32>
    %28 = vector.shape_cast %27 : vector<1x8xf32> to vector<1x1x8xf32>
    %29 = tpu.reciprocal %28 : vector<1x1x8xf32> -> vector<1x1x8xf32>
    %30 = vector.broadcast %29 : vector<1x1x8xf32> to vector<1x8x8xf32>
    %31 = arith.mulf %26, %30 : vector<1x8x8xf32>
    %c0_21 = arith.constant 0 : index
    %c0_22 = arith.constant 0 : index
    %c0_23 = arith.constant 0 : index
    %32 = vector.load %arg14[%c0_21, %c0_22, %c0_23] : memref<1x8x8xf32, #tpu.memory_space<vmem>>, vector<1x8x8xf32>
    %33 = arith.maximumf %32, %31 : vector<1x8x8xf32>
    %c0_24 = arith.constant 0 : index
    %c0_25 = arith.constant 0 : index
    %c0_26 = arith.constant 0 : index
    %34 = vector.load %arg14[%c0_24, %c0_25, %c0_26] : memref<1x8x8xf32, #tpu.memory_space<vmem>>, vector<1x8x8xf32>
    tpu.vector_store %arg14[%c0_24, %c0_25, %c0_26], %33 {strides = array<i32>} : memref<1x8x8xf32, #tpu.memory_space<vmem>>, vector<1x8x8xf32>,
    %c0_i32_27 = arith.constant 0 : i32
    %35 = arith.cmpi eq, %arg1, %c0_i32_27 : i32
    %36 = arith.extui %35 : i1 to i32
    %c0_i32_28 = arith.constant 0 : i32
    %37 = arith.cmpi ne, %36, %c0_i32_28 : i32
    scf.if %37 {
      %c0_29 = arith.constant 0 : index
      %c0_30 = arith.constant 0 : index
      %c0_31 = arith.constant 0 : index
      %38 = vector.load %arg14[%c0_29, %c0_30, %c0_31] : memref<1x8x8xf32, #tpu.memory_space<vmem>>, vector<1x8x8xf32>
      %cst_32 = arith.constant dense<0xFF800000> : vector<1x8xf32>
      %39 = vector.multi_reduction <maximumf>, %38, %cst_32 [2] : vector<1x8x8xf32> to vector<1x8xf32>
      %40 = vector.shape_cast %39 : vector<1x8xf32> to vector<1x8x1xf32>
      %c0_33 = arith.constant 0 : index
      %c0_34 = arith.constant 0 : index
      %c0_35 = arith.constant 0 : index
      %41 = vector.load %arg3[%c0_33, %c0_34, %c0_35] : memref<1x8x32xf32, #tpu.memory_space<vmem>>, vector<1x8x32xf32>
      %cst_36 = arith.constant 1.000000e+00 : f32
      %42 = vector.broadcast %cst_36 : f32 to vector<1x8x1xf32>
      %43 = arith.addf %40, %42 : vector<1x8x1xf32>
      %44 = vector.broadcast %43 : vector<1x8x1xf32> to vector<1x8x32xf32>
      %45 = arith.mulf %44, %41 : vector<1x8x32xf32>
      %c0_37 = arith.constant 0 : index
      %c0_38 = arith.constant 0 : index
      %c0_39 = arith.constant 0 : index
      %46 = vector.load %arg12[%c0_37, %c0_38, %c0_39] : memref<1x8x32xf32, #tpu.memory_space<vmem>>, vector<1x8x32xf32>
      tpu.vector_store %arg12[%c0_37, %c0_38, %c0_39], %45 {strides = array<i32>} : memref<1x8x32xf32, #tpu.memory_space<vmem>>, vector<1x8x32xf32>,
    } else {
    }
    return
  }
  func.func @transform_0(%arg0: i32, %arg1: i32) -> (i32, i32, i32) {
    %c0_i32 = arith.constant 0 : i32
    %c0_i32_0 = arith.constant 0 : i32
    return %arg0, %arg1, %c0_i32 : i32, i32, i32
  }
  func.func @transform_1(%arg0: i32, %arg1: i32) -> (i32, i32, i32) {
    %c0_i32 = arith.constant 0 : i32
    %c0_i32_0 = arith.constant 0 : i32
    %c0_i32_1 = arith.constant 0 : i32
    return %arg0, %c0_i32, %c0_i32_0 : i32, i32, i32
  }
  func.func @transform_2(%arg0: i32, %arg1: i32) -> (i32, i32) {
    %c0_i32 = arith.constant 0 : i32
    %c0_i32_0 = arith.constant 0 : i32
    %c0_i32_1 = arith.constant 0 : i32
    return %c0_i32, %c0_i32_0 : i32, i32
  }
  func.func @transform_3(%arg0: i32, %arg1: i32) -> (i32, i32) {
    %c0_i32 = arith.constant 0 : i32
    %c0_i32_0 = arith.constant 0 : i32
    %c0_i32_1 = arith.constant 0 : i32
    return %c0_i32, %c0_i32_0 : i32, i32
  }
  func.func @transform_4(%arg0: i32, %arg1: i32) -> (i32, i32) {
    %c0_i32 = arith.constant 0 : i32
    %c0_i32_0 = arith.constant 0 : i32
    %c0_i32_1 = arith.constant 0 : i32
    return %c0_i32, %c0_i32_0 : i32, i32
  }
  func.func @transform_5(%arg0: i32, %arg1: i32) -> (i32, i32) {
    %c0_i32 = arith.constant 0 : i32
    %c0_i32_0 = arith.constant 0 : i32
    %c0_i32_1 = arith.constant 0 : i32
    return %c0_i32, %c0_i32_0 : i32, i32
  }
  func.func @transform_6(%arg0: i32, %arg1: i32) -> (i32, i32) {
    %c0_i32 = arith.constant 0 : i32
    %c0_i32_0 = arith.constant 0 : i32
    %c0_i32_1 = arith.constant 0 : i32
    return %c0_i32, %c0_i32_0 : i32, i32
  }
  func.func @transform_7(%arg0: i32, %arg1: i32) -> (i32, i32) {
    %c0_i32 = arith.constant 0 : i32
    %c0_i32_0 = arith.constant 0 : i32
    %c0_i32_1 = arith.constant 0 : i32
    return %c0_i32, %c0_i32_0 : i32, i32
  }
  func.func @transform_8(%arg0: i32, %arg1: i32) -> (i32, i32) {
    %c0_i32 = arith.constant 0 : i32
    %c0_i32_0 = arith.constant 0 : i32
    %c0_i32_1 = arith.constant 0 : i32
    return %c0_i32, %c0_i32_0 : i32, i32
  }
  func.func @transform_9(%arg0: i32, %arg1: i32) -> (i32, i32) {
    %c0_i32 = arith.constant 0 : i32
    %c0_i32_0 = arith.constant 0 : i32
    %c0_i32_1 = arith.constant 0 : i32
    return %c0_i32, %c0_i32_0 : i32, i32
  }
  func.func @transform_10(%arg0: i32, %arg1: i32) -> (i32, i32, i32) {
    %c0_i32 = arith.constant 0 : i32
    %c0_i32_0 = arith.constant 0 : i32
    %c0_i32_1 = arith.constant 0 : i32
    return %arg0, %c0_i32, %c0_i32_0 : i32, i32, i32
  }
  func.func @transform_11(%arg0: i32, %arg1: i32) -> (i32, i32, i32) {
    %c0_i32 = arith.constant 0 : i32
    %c0_i32_0 = arith.constant 0 : i32
    return %arg0, %c0_i32, %arg1 : i32, i32, i32
  }
}

</mosaic_0001>

<llo_original>
// kernel: tpu_custom_call.1
$region0: #{tpu_custom_call.1}
  #allocation0 [shape = 'u32[]', space=smem, size = 0x4, offset = 0x4, fixed_abs, tag = 'smem constant byte address 0x4 - core index']
  #allocation1 [shape = 'u32[72,128]{1,0:T(1,128)}', space=vmem, size = 0x9000, scoped, tag = 'internal scratch']
  #allocation2 [shape = 'f32[1,8,8]{2,1,0:T(8,128)}', space=vmem, size = 0x1000, scoped, tag = 'scratch operand']
  #allocation3 [shape = 'f32[1,8,64]{2,1,0:T(8,128)}', space=vmem, size = 0x1000, scoped, tag = 'scratch operand']
  %s0 = inlined_call_operand.hbm [shape: f32[2,8,32], index: 0, kind: input, shape index: {}]
  %s1 = inlined_call_operand.hbm [shape: f32[2,8,32], index: 1, kind: input, shape index: {}]
  %s2 = inlined_call_operand.hbm [shape: f32[32,64], index: 2, kind: input, shape index: {}]
  %s3 = inlined_call_operand.vmem [shape: f32[1,64], index: 3, kind: input, shape index: {}]
  %s4 = inlined_call_operand.vmem [shape: f32[1,64], index: 4, kind: input, shape index: {}]
  %s5 = inlined_call_operand.vmem [shape: f32[1,64], index: 5, kind: input, shape index: {}]
  %s6 = inlined_call_operand.hbm [shape: f32[32,64], index: 6, kind: input, shape index: {}]
  %s7 = inlined_call_operand.vmem [shape: f32[1,64], index: 7, kind: input, shape index: {}]
  %s8 = inlined_call_operand.vmem [shape: f32[1,64], index: 8, kind: input, shape index: {}]
  %s9 = inlined_call_operand.vmem [shape: f32[1,64], index: 9, kind: input, shape index: {}]
  %s10 = inlined_call_operand.hbm [shape: f32[2,8,32], index: 10, kind: output, shape index: {0}]
  %s11 = inlined_call_operand.hbm [shape: f32[2,8,8], index: 11, kind: output, shape index: {1}]
  %12 = xla_tuple %s10, %s11
  %s13 = sld [smem:[#allocation0]]
  $region105: #{tpu_custom_call.1} parent=0
    _
  %s15 = ssub.s32 1, %s13
  %s16 = scalar_select 0, %s15, %s13
  $region1: #{tpu_custom_call.1} parent=0
    #allocation4 [shape = 'u8[8192]{0}', space=vmem, size = 0x2000, scoped, tag = 'input window, operand 0']
    #allocation5 [shape = 's32[2]{0}', space=sflag, size = 0x8, scoped, tag = 'scoped memory for tpu_custom_call.1']
    #allocation6 [shape = 's32[2]{0}', space=sflag, size = 0x8, scoped, tag = 'scoped memory for tpu_custom_call.1']
    #allocation7 [shape = 'u8[4096]{0}', space=vmem, size = 0x1000, scoped, tag = 'input window, operand 1, single buffered']
    #allocation8 [shape = 's32[1]{0}', space=sflag, size = 0x4, scoped, tag = 'scoped memory for tpu_custom_call.1']
    #allocation9 [shape = 'u8[16384]{0}', space=vmem, size = 0x4000, scoped, tag = 'input window, operand 2, single buffered']
    #allocation10 [shape = 'u8[16384]{0}', space=vmem, size = 0x4000, scoped, tag = 'input window, operand 6, single buffered']
    #allocation11 [shape = 's32[1]{0}', space=sflag, size = 0x4, scoped, tag = 'scoped memory for tpu_custom_call.1']
    #allocation12 [shape = 'u8[8192]{0}', space=vmem, size = 0x2000, scoped, tag = 'output window, operand 0']
    #allocation13 [shape = 'u8[8192]{0}', space=vmem, size = 0x2000, scoped, tag = 'output window, operand 1']
    #allocation14 [shape = 's32[2]{0}', space=sflag, size = 0x8, scoped, tag = 'scoped memory for tpu_custom_call.1']
    %17 = vsyncpa [#allocation5], 0
    %s18 = scalar_lea.sflag [#allocation5], 1
    %19 = vsyncpa %s18, 0
    %20 = vsyncpa [#allocation8], 0
    %21 = vsyncpa [#allocation11], 0
    %22 = vsyncpa [#allocation6], 0
    %s23 = scalar_lea.sflag [#allocation6], 1
    %24 = vsyncpa %s23, 0
    %25 = vsyncpa [#allocation14], 0
    %s26 = scalar_lea.sflag [#allocation14], 1
    %27 = vsyncpa %s26, 0
    loop: start=0, step=1, limit=4
    $region2: #{tpu_custom_call.1} parent=1 // loop_pre_header
      _
    $region3: #{tpu_custom_call.1} parent=1 // loop_header
      %s29 = sphi 0, %s33
      %p30 = scmp.ge.s32.totalorder %s29, 4
      %s36 = sphi 0, %s48
      %s37 = sphi 0, %s44
      %s38 = sphi 0, %s36
      %s39 = sphi 0, %s37
      %s40 = sphi 0, %s38
      %s41 = sphi 0, %s39
      %s53 = sphi 0, %s55
      %s56 = sphi 0, %s53
      %s57 = sphi 0, %s56
      %s73 = sphi 0, %s57
      %s79 = sphi 0, %s81
      %s82 = sphi 0, %s79
      %s83 = sphi 0, %s82
      %s99 = sphi 0, %s83
      %s103 = sphi 0, %s103
      %s105 = sphi 0, %s103
      %s106 = sphi 0, %s105
      %s120 = sphi 0, %s106
      %s124 = sphi 0, %s124
      %s126 = sphi 0, %s124
      %s127 = sphi 0, %s126
      %s141 = sphi 0, %s127
      %s145 = sphi 0, %s145
      %s147 = sphi 0, %s145
      %s148 = sphi 0, %s147
      %s162 = sphi 0, %s148
      %s166 = sphi 0, %s166
      %s168 = sphi 0, %s166
      %s169 = sphi 0, %s168
      %s183 = sphi 0, %s169
      %s187 = sphi 0, %s187
      %s189 = sphi 0, %s187
      %s190 = sphi 0, %s189
      %s204 = sphi 0, %s190
      %s208 = sphi 0, %s208
      %s210 = sphi 0, %s208
      %s211 = sphi 0, %s210
      %s225 = sphi 0, %s211
      %s229 = sphi 0, %s229
      %s231 = sphi 0, %s229
      %s232 = sphi 0, %s231
      %s246 = sphi 0, %s232
      %s250 = sphi 0, %s250
      %s252 = sphi 0, %s250
      %s253 = sphi 0, %s252
      %s267 = sphi 0, %s253
      %s273 = sphi 0, %s275
      %s276 = sphi 0, %s273
      %s277 = sphi 0, %s276
      %s293 = sphi 0, %s277
      %s301 = sphi 0, %s303
      %s304 = sphi 0, %s301
      %s305 = sphi 0, %s304
      %s321 = sphi 0, %s305
    $region4: #{tpu_custom_call.1} parent=1 // loop_header_branch
      %32 = sbr.rel (%p30) target = $region8
    $region5: #{tpu_custom_call.1} parent=1 // loop_body
      %s34 = ssub.s32 %s29, 1
      %s35 = ssub.s32 %s29, 2
      %s42 = sadd.s32 1, %s37
      %p43 = scmp.ge.s32.totalorder %s42, 1
      %s44 = scalar_select %p43, 0, %s42
      %s45 = sadd.s32 1, %s36
      %s46 = scalar_select %p43, %s45, %s36
      %p47 = scmp.ge.s32.totalorder %s46, 2
      %s48 = scalar_select %p47, 0, %s46
      %s49 = ssub.s32 %s36, %s48
      %s50 = ssub.s32 %s37, %s44
      %s51 = sor.u32 %s49, %s50
      %p52 = scmp.eq.s32.totalorder %s51, 0
      %s54 = sadd.s32 %s53, 1
      %s55 = scalar_select %p52, %s53, %s54
      %p58 = pneg %p52
      %p59 = scmp.eq.s32.totalorder %s29, 1
      %p60 = por %p58, %p59
      %p61 = scmp.ne.s32.totalorder %s53, %s56
      %p62 = scmp.eq.s32.totalorder %s29, 0
      %p63 = por %p61, %p62
      %p64 = scmp.ne.s32.totalorder %s53, %s56
      %p65 = scmp.eq.s32.totalorder %s34, 1
      %p66 = por %p64, %p65
      %p67 = scmp.ne.s32.totalorder %s56, %s57
      %p68 = scmp.eq.s32.totalorder %s34, 0
      %p69 = por %p67, %p68
      %p70 = scmp.ne.s32.totalorder %s56, %s57
      %p71 = scmp.eq.s32.totalorder %s35, 1
      %p72 = por %p70, %p71
      %p74 = scmp.ne.s32.totalorder %s57, %s73
      %p75 = scmp.eq.s32.totalorder %s35, 0
      %p76 = por %p74, %p75
      %s77 = ssub.s32 %s36, %s48
      %p78 = scmp.eq.s32.totalorder %s77, 0
      %s80 = sadd.s32 %s79, 1
      %s81 = scalar_select %p78, %s79, %s80
      %p84 = pneg %p78
      %p85 = scmp.eq.s32.totalorder %s29, 1
      %p86 = por %p84, %p85
      %p87 = scmp.ne.s32.totalorder %s79, %s82
      %p88 = scmp.eq.s32.totalorder %s29, 0
      %p89 = por %p87, %p88
      %p90 = scmp.ne.s32.totalorder %s79, %s82
      %p91 = scmp.eq.s32.totalorder %s34, 1
      %p92 = por %p90, %p91
      %p93 = scmp.ne.s32.totalorder %s82, %s83
      %p94 = scmp.eq.s32.totalorder %s34, 0
      %p95 = por %p93, %p94
      %p96 = scmp.ne.s32.totalorder %s82, %s83
      %p97 = scmp.eq.s32.totalorder %s35, 1
      %p98 = por %p96, %p97
      %p100 = scmp.ne.s32.totalorder %s83, %s99
      %p101 = scmp.eq.s32.totalorder %s35, 0
      %p102 = por %p100, %p101
      %s104 = sadd.s32 %s103, 1
      %p107 = scmp.eq.s32.totalorder %s29, 1
      %p108 = scmp.ne.s32.totalorder %s103, %s105
      %p109 = scmp.eq.s32.totalorder %s29, 0
      %p110 = por %p108, %p109
      %p111 = scmp.ne.s32.totalorder %s103, %s105
      %p112 = scmp.eq.s32.totalorder %s34, 1
      %p113 = por %p111, %p112
      %p114 = scmp.ne.s32.totalorder %s105, %s106
      %p115 = scmp.eq.s32.totalorder %s34, 0
      %p116 = por %p114, %p115
      %p117 = scmp.ne.s32.totalorder %s105, %s106
      %p118 = scmp.eq.s32.totalorder %s35, 1
      %p119 = por %p117, %p118
      %p121 = scmp.ne.s32.totalorder %s106, %s120
      %p122 = scmp.eq.s32.totalorder %s35, 0
      %p123 = por %p121, %p122
      %s125 = sadd.s32 %s124, 1
      %p128 = scmp.eq.s32.totalorder %s29, 1
      %p129 = scmp.ne.s32.totalorder %s124, %s126
      %p130 = scmp.eq.s32.totalorder %s29, 0
      %p131 = por %p129, %p130
      %p132 = scmp.ne.s32.totalorder %s124, %s126
      %p133 = scmp.eq.s32.totalorder %s34, 1
      %p134 = por %p132, %p133
      %p135 = scmp.ne.s32.totalorder %s126, %s127
      %p136 = scmp.eq.s32.totalorder %s34, 0
      %p137 = por %p135, %p136
      %p138 = scmp.ne.s32.totalorder %s126, %s127
      %p139 = scmp.eq.s32.totalorder %s35, 1
      %p140 = por %p138, %p139
      %p142 = scmp.ne.s32.totalorder %s127, %s141
      %p143 = scmp.eq.s32.totalorder %s35, 0
      %p144 = por %p142, %p143
      %s146 = sadd.s32 %s145, 1
      %p149 = scmp.eq.s32.totalorder %s29, 1
      %p150 = scmp.ne.s32.totalorder %s145, %s147
      %p151 = scmp.eq.s32.totalorder %s29, 0
      %p152 = por %p150, %p151
      %p153 = scmp.ne.s32.totalorder %s145, %s147
      %p154 = scmp.eq.s32.totalorder %s34, 1
      %p155 = por %p153, %p154
      %p156 = scmp.ne.s32.totalorder %s147, %s148
      %p157 = scmp.eq.s32.totalorder %s34, 0
      %p158 = por %p156, %p157
      %p159 = scmp.ne.s32.totalorder %s147, %s148
      %p160 = scmp.eq.s32.totalorder %s35, 1
      %p161 = por %p159, %p160
      %p163 = scmp.ne.s32.totalorder %s148, %s162
      %p164 = scmp.eq.s32.totalorder %s35, 0
      %p165 = por %p163, %p164
      %s167 = sadd.s32 %s166, 1
      %p170 = scmp.eq.s32.totalorder %s29, 1
      %p171 = scmp.ne.s32.totalorder %s166, %s168
      %p172 = scmp.eq.s32.totalorder %s29, 0
      %p173 = por %p171, %p172
      %p174 = scmp.ne.s32.totalorder %s166, %s168
      %p175 = scmp.eq.s32.totalorder %s34, 1
      %p176 = por %p174, %p175
      %p177 = scmp.ne.s32.totalorder %s168, %s169
      %p178 = scmp.eq.s32.totalorder %s34, 0
      %p179 = por %p177, %p178
      %p180 = scmp.ne.s32.totalorder %s168, %s169
      %p181 = scmp.eq.s32.totalorder %s35, 1
      %p182 = por %p180, %p181
      %p184 = scmp.ne.s32.totalorder %s169, %s183
      %p185 = scmp.eq.s32.totalorder %s35, 0
      %p186 = por %p184, %p185
      %s188 = sadd.s32 %s187, 1
      %p191 = scmp.eq.s32.totalorder %s29, 1
      %p192 = scmp.ne.s32.totalorder %s187, %s189
      %p193 = scmp.eq.s32.totalorder %s29, 0
      %p194 = por %p192, %p193
      %p195 = scmp.ne.s32.totalorder %s187, %s189
      %p196 = scmp.eq.s32.totalorder %s34, 1
      %p197 = por %p195, %p196
      %p198 = scmp.ne.s32.totalorder %s189, %s190
      %p199 = scmp.eq.s32.totalorder %s34, 0
      %p200 = por %p198, %p199
      %p201 = scmp.ne.s32.totalorder %s189, %s190
      %p202 = scmp.eq.s32.totalorder %s35, 1
      %p203 = por %p201, %p202
      %p205 = scmp.ne.s32.totalorder %s190, %s204
      %p206 = scmp.eq.s32.totalorder %s35, 0
      %p207 = por %p205, %p206
      %s209 = sadd.s32 %s208, 1
      %p212 = scmp.eq.s32.totalorder %s29, 1
      %p213 = scmp.ne.s32.totalorder %s208, %s210
      %p214 = scmp.eq.s32.totalorder %s29, 0
      %p215 = por %p213, %p214
      %p216 = scmp.ne.s32.totalorder %s208, %s210
      %p217 = scmp.eq.s32.totalorder %s34, 1
      %p218 = por %p216, %p217
      %p219 = scmp.ne.s32.totalorder %s210, %s211
      %p220 = scmp.eq.s32.totalorder %s34, 0
      %p221 = por %p219, %p220
      %p222 = scmp.ne.s32.totalorder %s210, %s211
      %p223 = scmp.eq.s32.totalorder %s35, 1
      %p224 = por %p222, %p223
      %p226 = scmp.ne.s32.totalorder %s211, %s225
      %p227 = scmp.eq.s32.totalorder %s35, 0
      %p228 = por %p226, %p227
      %s230 = sadd.s32 %s229, 1
      %p233 = scmp.eq.s32.totalorder %s29, 1
      %p234 = scmp.ne.s32.totalorder %s229, %s231
      %p235 = scmp.eq.s32.totalorder %s29, 0
      %p236 = por %p234, %p235
      %p237 = scmp.ne.s32.totalorder %s229, %s231
      %p238 = scmp.eq.s32.totalorder %s34, 1
      %p239 = por %p237, %p238
      %p240 = scmp.ne.s32.totalorder %s231, %s232
      %p241 = scmp.eq.s32.totalorder %s34, 0
      %p242 = por %p240, %p241
      %p243 = scmp.ne.s32.totalorder %s231, %s232
      %p244 = scmp.eq.s32.totalorder %s35, 1
      %p245 = por %p243, %p244
      %p247 = scmp.ne.s32.totalorder %s232, %s246
      %p248 = scmp.eq.s32.totalorder %s35, 0
      %p249 = por %p247, %p248
      %s251 = sadd.s32 %s250, 1
      %p254 = scmp.eq.s32.totalorder %s29, 1
      %p255 = scmp.ne.s32.totalorder %s250, %s252
      %p256 = scmp.eq.s32.totalorder %s29, 0
      %p257 = por %p255, %p256
      %p258 = scmp.ne.s32.totalorder %s250, %s252
      %p259 = scmp.eq.s32.totalorder %s34, 1
      %p260 = por %p258, %p259
      %p261 = scmp.ne.s32.totalorder %s252, %s253
      %p262 = scmp.eq.s32.totalorder %s34, 0
      %p263 = por %p261, %p262
      %p264 = scmp.ne.s32.totalorder %s252, %s253
      %p265 = scmp.eq.s32.totalorder %s35, 1
      %p266 = por %p264, %p265
      %p268 = scmp.ne.s32.totalorder %s253, %s267
      %p269 = scmp.eq.s32.totalorder %s35, 0
      %p270 = por %p268, %p269
      %s271 = ssub.s32 %s36, %s48
      %p272 = scmp.eq.s32.totalorder %s271, 0
      %s274 = sadd.s32 %s273, 1
      %s275 = scalar_select %p272, %s273, %s274
      %p278 = pneg %p272
      %p279 = scmp.eq.s32.totalorder %s29, 1
      %p280 = por %p278, %p279
      %p281 = scmp.ne.s32.totalorder %s273, %s276
      %p282 = scmp.eq.s32.totalorder %s29, 0
      %p283 = por %p281, %p282
      %p284 = scmp.ne.s32.totalorder %s273, %s276
      %p285 = scmp.eq.s32.totalorder %s34, 1
      %p286 = por %p284, %p285
      %p287 = scmp.ne.s32.totalorder %s276, %s277
      %p288 = scmp.eq.s32.totalorder %s34, 0
      %p289 = por %p287, %p288
      %p290 = scmp.ne.s32.totalorder %s276, %s277
      %p291 = scmp.eq.s32.totalorder %s35, 1
      %p292 = por %p290, %p291
      %p294 = scmp.ne.s32.totalorder %s277, %s293
      %p295 = scmp.eq.s32.totalorder %s35, 0
      %p296 = por %p294, %p295
      %s297 = ssub.s32 %s36, %s48
      %s298 = ssub.s32 %s37, %s44
      %s299 = sor.u32 %s297, %s298
      %p300 = scmp.eq.s32.totalorder %s299, 0
      %s302 = sadd.s32 %s301, 1
      %s303 = scalar_select %p300, %s301, %s302
      %p306 = pneg %p300
      %p307 = scmp.eq.s32.totalorder %s29, 1
      %p308 = por %p306, %p307
      %p309 = scmp.ne.s32.totalorder %s301, %s304
      %p310 = scmp.eq.s32.totalorder %s29, 0
      %p311 = por %p309, %p310
      %p312 = scmp.ne.s32.totalorder %s301, %s304
      %p313 = scmp.eq.s32.totalorder %s34, 1
      %p314 = por %p312, %p313
      %p315 = scmp.ne.s32.totalorder %s304, %s305
      %p316 = scmp.eq.s32.totalorder %s34, 0
      %p317 = por %p315, %p316
      %p318 = scmp.ne.s32.totalorder %s304, %s305
      %p319 = scmp.eq.s32.totalorder %s35, 1
      %p320 = por %p318, %p319
      %p322 = scmp.ne.s32.totalorder %s305, %s321
      %p323 = scmp.eq.s32.totalorder %s35, 0
      %p324 = por %p322, %p323
      %p325 = scmp.le.s32.totalorder 1, %s29
      %p326 = scmp.lt.s32.totalorder %s29, 3
      %p327 = pnand %p325, %p326
      %p328 = pneg %p327
      // Predicated region
      $region9: #{tpu_custom_call.1} parent=5 // pred_check
        _
      $region10: #{tpu_custom_call.1} parent=5 // pred_check_branch
        %330 = sbr.rel (%p327) target = $region12
      $region11: #{tpu_custom_call.1} parent=5 // pred_region
        %s331 = ssub.s32 %s29, 1
        // Predicated region
        $region13: #{tpu_custom_call.1} parent=11 // pred_check
          %p332 = pneg %p95
        $region14: #{tpu_custom_call.1} parent=11 // pred_check_branch
          %334 = sbr.rel (%p332) target = $region16
        $region15: #{tpu_custom_call.1} parent=11 // pred_region
          %336 = vsyncadd [#allocation8], 0
          %s337 = smul.addr %s38, 8
          %s338 = scalar_lea.hbm %s1, %s337
          %s340 = sshll.u32 %s338, 4
          %s341 = int_to_ptr.hbm [resolvable:$true] %s340
          %s342 = sshll.u32 [#allocation7], 4
          %s343 = int_to_ptr.vmem [resolvable:$true] %s342
          %345 = dma.hbm_to_vmem [thread:$0]  %s341, 128, %s343, [#allocation8]
        $region16: #{tpu_custom_call.1} parent=11 // pred_fallthru
          _
        // Predicated region
        $region17: #{tpu_custom_call.1} parent=11 // pred_check
          %p346 = pneg %p116
        $region18: #{tpu_custom_call.1} parent=11 // pred_check_branch
          %348 = sbr.rel (%p346) target = $region20
        $region19: #{tpu_custom_call.1} parent=11 // pred_region
          %350 = vsyncadd [#allocation8], 0
          %s351 = sshll.u32 %s2, 4
          %s352 = int_to_ptr.hbm [resolvable:$true] %s351
          %s353 = sshll.u32 [#allocation9], 4
          %s354 = int_to_ptr.vmem [resolvable:$true] %s353
          %359 = dma.hbm_to_vmem [thread:$0]  %s352, 512, %s354, [#allocation8], 128, 128, 8
        $region20: #{tpu_custom_call.1} parent=11 // pred_fallthru
          _
        // Predicated region
        $region21: #{tpu_custom_call.1} parent=11 // pred_check
          %p360 = pneg %p137
        $region22: #{tpu_custom_call.1} parent=11 // pred_check_branch
          %362 = sbr.rel (%p360) target = $region24
        $region23: #{tpu_custom_call.1} parent=11 // pred_region
          _
        $region24: #{tpu_custom_call.1} parent=11 // pred_fallthru
          _
        // Predicated region
        $region25: #{tpu_custom_call.1} parent=11 // pred_check
          %p363 = pneg %p158
        $region26: #{tpu_custom_call.1} parent=11 // pred_check_branch
          %365 = sbr.rel (%p363) target = $region28
        $region27: #{tpu_custom_call.1} parent=11 // pred_region
          _
        $region28: #{tpu_custom_call.1} parent=11 // pred_fallthru
          _
        // Predicated region
        $region29: #{tpu_custom_call.1} parent=11 // pred_check
          %p366 = pneg %p179
        $region30: #{tpu_custom_call.1} parent=11 // pred_check_branch
          %368 = sbr.rel (%p366) target = $region32
        $region31: #{tpu_custom_call.1} parent=11 // pred_region
          _
        $region32: #{tpu_custom_call.1} parent=11 // pred_fallthru
          _
        // Predicated region
        $region33: #{tpu_custom_call.1} parent=11 // pred_check
          %p369 = pneg %p200
        $region34: #{tpu_custom_call.1} parent=11 // pred_check_branch
          %371 = sbr.rel (%p369) target = $region36
        $region35: #{tpu_custom_call.1} parent=11 // pred_region
          %373 = vsyncadd [#allocation11], 0
          %s374 = sshll.u32 %s6, 4
          %s375 = int_to_ptr.hbm [resolvable:$true] %s374
          %s376 = sshll.u32 [#allocation10], 4
          %s377 = int_to_ptr.vmem [resolvable:$true] %s376
          %382 = dma.hbm_to_vmem [thread:$0]  %s375, 512, %s377, [#allocation11], 128, 128, 8
        $region36: #{tpu_custom_call.1} parent=11 // pred_fallthru
          _
        // Predicated region
        $region37: #{tpu_custom_call.1} parent=11 // pred_check
          %p383 = pneg %p221
        $region38: #{tpu_custom_call.1} parent=11 // pred_check_branch
          %385 = sbr.rel (%p383) target = $region40
        $region39: #{tpu_custom_call.1} parent=11 // pred_region
          _
        $region40: #{tpu_custom_call.1} parent=11 // pred_fallthru
          _
        // Predicated region
        $region41: #{tpu_custom_call.1} parent=11 // pred_check
          %p386 = pneg %p242
        $region42: #{tpu_custom_call.1} parent=11 // pred_check_branch
          %388 = sbr.rel (%p386) target = $region44
        $region43: #{tpu_custom_call.1} parent=11 // pred_region
          _
        $region44: #{tpu_custom_call.1} parent=11 // pred_fallthru
          _
        // Predicated region
        $region45: #{tpu_custom_call.1} parent=11 // pred_check
          %p389 = pneg %p263
        $region46: #{tpu_custom_call.1} parent=11 // pred_check_branch
          %391 = sbr.rel (%p389) target = $region48
        $region47: #{tpu_custom_call.1} parent=11 // pred_region
          _
        $region48: #{tpu_custom_call.1} parent=11 // pred_fallthru
          _
      $region12: #{tpu_custom_call.1} parent=5 // pred_fallthru
        _
      %p392 = scmp.lt.s32.totalorder %s29, 2
      // Predicated region
      $region49: #{tpu_custom_call.1} parent=5 // pred_check
        %p393 = pneg %p392
      $region50: #{tpu_custom_call.1} parent=5 // pred_check_branch
        %395 = sbr.rel (%p393) target = $region52
      $region51: #{tpu_custom_call.1} parent=5 // pred_region
        // Predicated region
        $region53: #{tpu_custom_call.1} parent=51 // pred_check
          %p396 = pneg %p63
        $region54: #{tpu_custom_call.1} parent=51 // pred_check_branch
          %398 = sbr.rel (%p396) target = $region56
        $region55: #{tpu_custom_call.1} parent=51 // pred_region
          %s399 = sand.u32 %s53, 1
          %s400 = scalar_lea.sflag [#allocation5], %s399
          %s401 = sand.u32 %s53, 1
          %s402 = smul.addr %s401, 8
          %s403 = scalar_lea.vmem [#allocation4], %s402
          %405 = vsyncadd %s400, 0
          %s406 = sadd.s32 %s37, %s36
          %s407 = smul.addr %s406, 8
          %s408 = scalar_lea.hbm %s0, %s407
          %s410 = sshll.u32 %s408, 4
          %s411 = int_to_ptr.hbm [resolvable:$true] %s410
          %s412 = sshll.u32 %s403, 4
          %s413 = int_to_ptr.vmem [resolvable:$true] %s412
          %415 = dma.hbm_to_vmem [thread:$0]  %s411, 128, %s413, %s400
        $region56: #{tpu_custom_call.1} parent=51 // pred_fallthru
          _
      $region52: #{tpu_custom_call.1} parent=5 // pred_fallthru
        _
      %p416 = scmp.le.s32.totalorder 1, %s29
      %p417 = scmp.lt.s32.totalorder %s29, 3
      %p418 = pnand %p416, %p417
      %p419 = pneg %p418
      // Predicated region
      $region57: #{tpu_custom_call.1} parent=5 // pred_check
        _
      $region58: #{tpu_custom_call.1} parent=5 // pred_check_branch
        %421 = sbr.rel (%p418) target = $region60
      $region59: #{tpu_custom_call.1} parent=5 // pred_region
        %s422 = ssub.s32 %s29, 1
        %s423 = sand.u32 %s56, 1
        %s424 = scalar_lea.sflag [#allocation5], %s423
        %s425 = sand.u32 %s56, 1
        %s426 = smul.addr %s425, 8
        %s427 = scalar_lea.vmem [#allocation4], %s426
        // Predicated region
        $region61: #{tpu_custom_call.1} parent=59 // pred_check
          %p428 = pneg %p69
        $region62: #{tpu_custom_call.1} parent=59 // pred_check_branch
          %430 = sbr.rel (%p428) target = $region64
        $region63: #{tpu_custom_call.1} parent=59 // pred_region
          %432 = dma.done %s424, 128
        $region64: #{tpu_custom_call.1} parent=59 // pred_fallthru
          _
        // Predicated region
        $region65: #{tpu_custom_call.1} parent=59 // pred_check
          %p433 = pneg %p95
        $region66: #{tpu_custom_call.1} parent=59 // pred_check_branch
          %435 = sbr.rel (%p433) target = $region68
        $region67: #{tpu_custom_call.1} parent=59 // pred_region
          %437 = dma.done [#allocation8], 128
        $region68: #{tpu_custom_call.1} parent=59 // pred_fallthru
          _
        // Predicated region
        $region69: #{tpu_custom_call.1} parent=59 // pred_check
          %p438 = pneg %p116
        $region70: #{tpu_custom_call.1} parent=59 // pred_check_branch
          %440 = sbr.rel (%p438) target = $region72
        $region71: #{tpu_custom_call.1} parent=59 // pred_region
          %442 = dma.done [#allocation8], 512
        $region72: #{tpu_custom_call.1} parent=59 // pred_fallthru
          _
        // Predicated region
        $region73: #{tpu_custom_call.1} parent=59 // pred_check
          %p443 = pneg %p200
        $region74: #{tpu_custom_call.1} parent=59 // pred_check_branch
          %445 = sbr.rel (%p443) target = $region76
        $region75: #{tpu_custom_call.1} parent=59 // pred_region
          %447 = dma.done [#allocation11], 512
        $region76: #{tpu_custom_call.1} parent=59 // pred_fallthru
          _
        %s448 = sand.u32 %s56, 1
        %s449 = scalar_lea.sflag [#allocation5], %s448
        %s450 = sand.u32 %s56, 1
        %s451 = smul.addr %s450, 8
        %s452 = scalar_lea.vmem [#allocation4], %s451
        %p453 = pneg %p69
        %p454 = pneg %p66
        %p455 = pneg %p95
        %p456 = pneg %p92
        %p457 = pneg %p116
        %p458 = pneg %p113
        %p459 = pneg %p137
        %p460 = pneg %p134
        %p461 = pneg %p158
        %p462 = pneg %p155
        %p463 = pneg %p179
        %p464 = pneg %p176
        %p465 = pneg %p200
        %p466 = pneg %p197
        %p467 = pneg %p221
        %p468 = pneg %p218
        %p469 = pneg %p242
        %p470 = pneg %p239
        %p471 = pneg %p263
        %p472 = pneg %p260
        %p473 = pneg %p289
        %p474 = pneg %p286
        %s475 = sand.u32 %s276, 1
        %s476 = scalar_lea.sflag [#allocation6], %s475
        %s477 = sand.u32 %s276, 1
        %s478 = smul.addr %s477, 8
        %s479 = scalar_lea.vmem [#allocation12], %s478
        %p480 = pneg %p317
        %p481 = pneg %p314
        %s482 = sand.u32 %s304, 1
        %s483 = scalar_lea.sflag [#allocation14], %s482
        %s484 = sand.u32 %s304, 1
        %s485 = smul.addr %s484, 8
        %s486 = scalar_lea.vmem [#allocation13], %s485
        %p487 = scmp.eq.s32.totalorder %s39, 0
        // Predicated region
        $region77: #{tpu_custom_call.1} parent=59 // pred_check
          %p488 = pneg %p487
        $region78: #{tpu_custom_call.1} parent=59 // pred_check_branch
          %490 = sbr.rel (%p488) target = $region80
        $region79: #{tpu_custom_call.1} parent=59 // pred_region
          %v491 = vld [vmem:[#allocation7] sm:$0xff]
          %v492 = vld [vmem:[#allocation10] sm:$0xff]
          %v493 = vld [vmem:[#allocation10 + $0x8] sm:$0xff]
          %v494 = vld [vmem:[#allocation10 + $0x10] sm:$0xff]
          %v495 = vld [vmem:[#allocation10 + $0x18] sm:$0xff]
          %v496 = vld [vmem:[%s7] sm:$0x1]
          %v498 = vperm.slane %v496, 0
          %vm500 = vcmask 261120
          %v502 = vsel %vm500, %v491, 0
          %504 = vmatpush.msra.mxu0 0.0
          %505 = vmatpush.msra.mxu0 0.0
          %506 = vmatpush.msra.mxu0 0.0
          %507 = vmatpush.msra.mxu0 0.0
          %508 = vmatpush.msra.mxu0 0.0
          %509 = vmatpush.msra.mxu0 0.0
          %510 = vmatpush.msra.mxu0 0.0
          %511 = vmatpush.msra.mxu0 0.0
          %512 = vmatpush.msra.mxu0 0.0
          %513 = vmatpush.msra.mxu0 0.0
          %514 = vmatpush.msra.mxu0 0.0
          %515 = vmatpush.msra.mxu0 0.0
          %516 = vmatpush.msra.mxu0 %v495
          %517 = vmatpush.msra.mxu0 %v494
          %518 = vmatpush.msra.mxu0 %v493
          %519 = vmatpush.msra.mxu0 %v492
          %520 = vmatmul.f32.gmra.mxu0 %v502
          %v521 = vpop.f32.mrf.mxu0
          %v522 = vadd.f32 %v498, %v521
          %523 = vdwg.mxu0
          %v524 = vmax.f32 %v522, 0.0
          %v525 = vld [vmem:[%s8] sm:$0x1]
          %v527 = vperm.slane %v525, 0
          %v529 = vmul.f32 %v524, %v527
          %v530 = vld [vmem:[%s9] sm:$0x1]
          %v532 = vperm.slane %v530, 0
          %v534 = vadd.f32 %v529, %v532
          %vm535 = vcmask 523264
          %536 = vst.msk [vmem:[#allocation3] sm:$0xff] %vm535, %v534
          %vm537 = vcmask 64512
          %538 = vst.msk [vmem:[#allocation2] sm:$0xff] %vm537, 0.0
        $region80: #{tpu_custom_call.1} parent=59 // pred_fallthru
          _
        %v539 = vld [vmem:[%s427] sm:$0xff]
        %v540 = vld [vmem:[#allocation9] sm:$0xff]
        %v541 = vld [vmem:[#allocation9 + $0x8] sm:$0xff]
        %v542 = vld [vmem:[#allocation9 + $0x10] sm:$0xff]
        %v543 = vld [vmem:[#allocation9 + $0x18] sm:$0xff]
        %v544 = vld [vmem:[%s3] sm:$0x1]
        %v546 = vperm.slane %v544, 0
        %vm548 = vcmask 261120
        %v550 = vsel %vm548, %v539, 0
        %552 = vmatpush.msra.mxu0 0.0
        %553 = vmatpush.msra.mxu0 0.0
        %554 = vmatpush.msra.mxu0 0.0
        %555 = vmatpush.msra.mxu0 0.0
        %556 = vmatpush.msra.mxu0 0.0
        %557 = vmatpush.msra.mxu0 0.0
        %558 = vmatpush.msra.mxu0 0.0
        %559 = vmatpush.msra.mxu0 0.0
        %560 = vmatpush.msra.mxu0 0.0
        %561 = vmatpush.msra.mxu0 0.0
        %562 = vmatpush.msra.mxu0 0.0
        %563 = vmatpush.msra.mxu0 0.0
        %564 = vmatpush.msra.mxu0 %v543
        %565 = vmatpush.msra.mxu0 %v542
        %566 = vmatpush.msra.mxu0 %v541
        %567 = vmatpush.msra.mxu0 %v540
        %568 = vmatmul.f32.gmra.mxu0 %v550
        %v569 = vpop.f32.mrf.mxu0
        %v570 = vadd.f32 %v546, %v569
        %571 = vdwg.mxu0
        %v572 = vmax.f32 %v570, 0.0
        %v573 = vld [vmem:[%s4] sm:$0x1]
        %v575 = vperm.slane %v573, 0
        %v577 = vmul.f32 %v572, %v575
        %v578 = vld [vmem:[%s5] sm:$0x1]
        %v580 = vperm.slane %v578, 0
        %v582 = vadd.f32 %v577, %v580
        %v583 = vld [vmem:[#allocation3] sm:$0xff]
        %vm584 = vcmask 523264
        %v586 = vsel %vm584, %v583, 0
        %v589 = vsel %vm584, %v582, 0
        %591 = vmatpush.xpose.msra.mxu0 0.0
        %592 = vmatpush.xpose.msra.mxu0 0.0
        %593 = vmatpush.xpose.msra.mxu0 0.0
        %594 = vmatpush.xpose.msra.mxu0 0.0
        %595 = vmatpush.xpose.msra.mxu0 0.0
        %596 = vmatpush.xpose.msra.mxu0 0.0
        %597 = vmatpush.xpose.msra.mxu0 0.0
        %598 = vmatpush.xpose.msra.mxu0 0.0
        %599 = vmatpush.xpose.msra.mxu0 0.0
        %600 = vmatpush.xpose.msra.mxu0 0.0
        %601 = vmatpush.xpose.msra.mxu0 0.0
        %602 = vmatpush.xpose.msra.mxu0 0.0
        %603 = vmatpush.xpose.msra.mxu0 0.0
        %604 = vmatpush.xpose.msra.mxu0 0.0
        %605 = vmatpush.xpose.msra.mxu0 0.0
        %606 = vmatpush.xpose.msra.mxu0 %v589
        %607 = vmatmul.f32.gmra.mxu0 %v586
        %v608 = vpop.f32.mrf.mxu0
        %v609 = vadd.f32 0.0, %v608
        %610 = vdwg.mxu0
        %vm611 = vcmask 64512
        %612 = vst.msk [vmem:[%s486] sm:$0xff] %vm611, %v609
        %v613 = vsel %vm611, %v609, -inf
        %v614 = vrot.slane %v613, 4
        %v615 = vmax.f32 %v613, %v614
        %v616 = vrot.slane %v615, 2
        %v617 = vmax.f32 %v615, %v616
        %v618 = vrot.slane %v617, 1
        %v619 = vmax.f32 %v617, %v618
        %v620 = vsub.f32 %v609, %v619
        %v621 = vmul.f32 %v620, 1.442695
        %v622 = vpow.pop %v621
        %v623 = vsel %vm611, %v622, 0.0
        %v624 = vrot.slane %v623, 4
        %v625 = vadd.f32 %v623, %v624
        %v626 = vrot.slane %v625, 2
        %v627 = vadd.f32 %v625, %v626
        %v628 = vrot.slane %v627, 1
        %v629 = vadd.f32 %v627, %v628
        %v630 = vrcp.pop %v629
        %v631 = vmul.f32 %v629, %v630
        %v632 = vsub.f32 1.0, %v631
        %v633 = vmul.f32 %v630, %v632
        %v634 = vadd.f32 %v630, %v633
        %vm635 = vweird.f32 %v629
        %vm636 = vweird.f32 %v630
        %vm637 = vmor %vm635, %vm636
        %v638 = vsel %vm637, %v630, %v634
        %v639 = vand.u32 2147483647, %v629
        %vm640 = vcmp.eq.f32.partialorder %v639, 8.507059e+37
        %v641 = vand.u32 %v629, 2147483648
        %v642 = vor.u32 1.1754944e-38, %v641
        %v643 = vsel %vm640, %v642, %v638
        %v644 = vmul.f32 %v622, %v643
        %v645 = vld [vmem:[#allocation2] sm:$0xff]
        %v646 = vmax.f32 %v645, %v644
        %647 = vst.msk [vmem:[#allocation2] sm:$0xff] %vm611, %v646
        // Predicated region
        $region81: #{tpu_custom_call.1} parent=59 // pred_check
          %p648 = pneg %p487
        $region82: #{tpu_custom_call.1} parent=59 // pred_check_branch
          %650 = sbr.rel (%p648) target = $region84
        $region83: #{tpu_custom_call.1} parent=59 // pred_region
          %v651 = vld [vmem:[#allocation2] sm:$0xff]
          %v652 = vsel %vm611, %v651, -inf
          %653 = vmax.xlane.f32.xlu0 %v652
          %v654 = vpop.xlane.xlu0 %653
          %v655 = vld [vmem:[#allocation7] sm:$0xff]
          %v656 = vadd.f32 %v654, 1.0
          %v657 = vmul.f32 %v656, %v655
          %658 = vst.msk [vmem:[%s479] sm:$0xff] %vm548, %v657
        $region84: #{tpu_custom_call.1} parent=59 // pred_fallthru
          _
        %s659 = sand.u32 %s276, 1
        %s660 = scalar_lea.sflag [#allocation6], %s659
        %s661 = sand.u32 %s276, 1
        %s662 = smul.addr %s661, 8
        %s663 = scalar_lea.vmem [#allocation12], %s662
        %s664 = sand.u32 %s304, 1
        %s665 = scalar_lea.sflag [#allocation14], %s664
        %s666 = sand.u32 %s304, 1
        %s667 = smul.addr %s666, 8
        %s668 = scalar_lea.vmem [#allocation13], %s667
        // Predicated region
        $region85: #{tpu_custom_call.1} parent=59 // pred_check
          %p669 = pneg %p286
        $region86: #{tpu_custom_call.1} parent=59 // pred_check_branch
          %671 = sbr.rel (%p669) target = $region88
        $region87: #{tpu_custom_call.1} parent=59 // pred_region
          %673 = vsyncadd %s660, 0
          %s674 = smul.addr %s38, 8
          %s675 = scalar_lea.hbm %s10, %s674
          %s677 = sshll.u32 %s663, 4
          %s678 = int_to_ptr.vmem [resolvable:$true] %s677
          %s679 = sshll.u32 %s675, 4
          %s680 = int_to_ptr.hbm [resolvable:$true] %s679
          %682 = dma.vmem_to_hbm [thread:$0]  %s678, 128, %s680, %s660
        $region88: #{tpu_custom_call.1} parent=59 // pred_fallthru
          _
        // Predicated region
        $region89: #{tpu_custom_call.1} parent=59 // pred_check
          %p683 = pneg %p314
        $region90: #{tpu_custom_call.1} parent=59 // pred_check_branch
          %685 = sbr.rel (%p683) target = $region92
        $region91: #{tpu_custom_call.1} parent=59 // pred_region
          %687 = vsyncadd %s665, 0
          %s688 = sadd.s32 %s39, %s38
          %s689 = smul.addr %s688, 8
          %s690 = scalar_lea.hbm %s11, %s689
          %s692 = sshll.u32 %s668, 4
          %s693 = int_to_ptr.vmem [resolvable:$true] %s692
          %s694 = sshll.u32 %s690, 4
          %s695 = int_to_ptr.hbm [resolvable:$true] %s694
          %697 = dma.vmem_to_hbm [thread:$0]  %s693, 128, %s695, %s665
        $region92: #{tpu_custom_call.1} parent=59 // pred_fallthru
          _
      $region60: #{tpu_custom_call.1} parent=5 // pred_fallthru
        _
      %p698 = scmp.le.s32.totalorder 2, %s29
      // Predicated region
      $region93: #{tpu_custom_call.1} parent=5 // pred_check
        %p699 = pneg %p698
      $region94: #{tpu_custom_call.1} parent=5 // pred_check_branch
        %701 = sbr.rel (%p699) target = $region96
      $region95: #{tpu_custom_call.1} parent=5 // pred_region
        %s702 = ssub.s32 %s29, 2
        // Predicated region
        $region97: #{tpu_custom_call.1} parent=95 // pred_check
          %p703 = pneg %p292
        $region98: #{tpu_custom_call.1} parent=95 // pred_check_branch
          %705 = sbr.rel (%p703) target = $region100
        $region99: #{tpu_custom_call.1} parent=95 // pred_region
          %s706 = sand.u32 %s277, 1
          %s707 = scalar_lea.sflag [#allocation6], %s706
          %s708 = sand.u32 %s277, 1
          %s709 = smul.addr %s708, 8
          %s710 = scalar_lea.vmem [#allocation12], %s709
          %712 = dma.done %s707, 128
        $region100: #{tpu_custom_call.1} parent=95 // pred_fallthru
          _
        // Predicated region
        $region101: #{tpu_custom_call.1} parent=95 // pred_check
          %p713 = pneg %p320
        $region102: #{tpu_custom_call.1} parent=95 // pred_check_branch
          %715 = sbr.rel (%p713) target = $region104
        $region103: #{tpu_custom_call.1} parent=95 // pred_region
          %s716 = sand.u32 %s305, 1
          %s717 = scalar_lea.sflag [#allocation14], %s716
          %s718 = sand.u32 %s305, 1
          %s719 = smul.addr %s718, 8
          %s720 = scalar_lea.vmem [#allocation13], %s719
          %722 = dma.done %s717, 128
        $region104: #{tpu_custom_call.1} parent=95 // pred_fallthru
          _
      $region96: #{tpu_custom_call.1} parent=5 // pred_fallthru
        _
    $region6: #{tpu_custom_call.1} parent=1 // loop_footer
      %s33 = sadd.s32 1, %s29
    $region7: #{tpu_custom_call.1} parent=1 // loop_footer_branch
      %28 = sbr.rel target = $region3
    $region8: #{tpu_custom_call.1} parent=1 // loop_exit
      _
    %723 = vsyncpa [#allocation5], 1
    %s724 = scalar_lea.sflag [#allocation5], 1
    %725 = vsyncpa %s724, 1
    %726 = vsyncpa [#allocation8], 1
    %727 = vsyncpa [#allocation11], 1
    %728 = vsyncpa [#allocation6], 1
    %s729 = scalar_lea.sflag [#allocation6], 1
    %730 = vsyncpa %s729, 1
    %731 = vsyncpa [#allocation14], 1
    %s732 = scalar_lea.sflag [#allocation14], 1
    %733 = vsyncpa %s732, 1

// kernel: tpu_custom_call.1
$region0: #{tpu_custom_call.1}
  #allocation0 [shape = 'u32[]', space=smem, size = 0x4, offset = 0x4, fixed_abs, tag = 'smem constant byte address 0x4 - core index']
  #allocation1 [shape = 'u32[72,128]{1,0:T(1,128)}', space=vmem, size = 0x9000, scoped, tag = 'internal scratch']
  #allocation2 [shape = 'f32[1,8,8]{2,1,0:T(8,128)}', space=vmem, size = 0x1000, scoped, tag = 'scratch operand']
  #allocation3 [shape = 'f32[1,8,64]{2,1,0:T(8,128)}', space=vmem, size = 0x1000, scoped, tag = 'scratch operand']
  %s0 = inlined_call_operand.hbm [shape: f32[2,8,32], index: 0, kind: input, shape index: {}]
  %s1 = inlined_call_operand.hbm [shape: f32[2,8,32], index: 1, kind: input, shape index: {}]
  %s2 = inlined_call_operand.hbm [shape: f32[32,64], index: 2, kind: input, shape index: {}]
  %s3 = inlined_call_operand.vmem [shape: f32[1,64], index: 3, kind: input, shape index: {}]
  %s4 = inlined_call_operand.vmem [shape: f32[1,64], index: 4, kind: input, shape index: {}]
  %s5 = inlined_call_operand.vmem [shape: f32[1,64], index: 5, kind: input, shape index: {}]
  %s6 = inlined_call_operand.hbm [shape: f32[32,64], index: 6, kind: input, shape index: {}]
  %s7 = inlined_call_operand.vmem [shape: f32[1,64], index: 7, kind: input, shape index: {}]
  %s8 = inlined_call_operand.vmem [shape: f32[1,64], index: 8, kind: input, shape index: {}]
  %s9 = inlined_call_operand.vmem [shape: f32[1,64], index: 9, kind: input, shape index: {}]
  %s10 = inlined_call_operand.hbm [shape: f32[2,8,32], index: 10, kind: output, shape index: {0}]
  %s11 = inlined_call_operand.hbm [shape: f32[2,8,8], index: 11, kind: output, shape index: {1}]
  %12 = xla_tuple %s10, %s11
  %s13 = sld [smem:[#allocation0]]
  $region105: #{tpu_custom_call.1} parent=0
    _
  %s15 = ssub.s32 1, %s13
  %s16 = scalar_select 0, %s15, %s13
  $region1: #{tpu_custom_call.1} parent=0
    #allocation4 [shape = 'u8[8192]{0}', space=vmem, size = 0x2000, scoped, tag = 'input window, operand 0']
    #allocation5 [shape = 's32[2]{0}', space=sflag, size = 0x8, scoped, tag = 'scoped memory for tpu_custom_call.1']
    #allocation6 [shape = 's32[2]{0}', space=sflag, size = 0x8, scoped, tag = 'scoped memory for tpu_custom_call.1']
    #allocation7 [shape = 'u8[8192]{0}', space=vmem, size = 0x2000, scoped, tag = 'input window, operand 1']
    #allocation8 [shape = 's32[2]{0}', space=sflag, size = 0x8, scoped, tag = 'scoped memory for tpu_custom_call.1']
    #allocation9 [shape = 'u8[16384]{0}', space=vmem, size = 0x4000, scoped, tag = 'input window, operand 2, single buffered']
    #allocation10 [shape = 'u8[16384]{0}', space=vmem, size = 0x4000, scoped, tag = 'input window, operand 6, single buffered']
    #allocation11 [shape = 's32[1]{0}', space=sflag, size = 0x4, scoped, tag = 'scoped memory for tpu_custom_call.1']
    #allocation12 [shape = 'u8[8192]{0}', space=vmem, size = 0x2000, scoped, tag = 'output window, operand 0']
    #allocation13 [shape = 'u8[8192]{0}', space=vmem, size = 0x2000, scoped, tag = 'output window, operand 1']
    #allocation14 [shape = 's32[2]{0}', space=sflag, size = 0x8, scoped, tag = 'scoped memory for tpu_custom_call.1']
    %17 = vsyncpa [#allocation5], 0
    %s18 = scalar_lea.sflag [#allocation5], 1
    %19 = vsyncpa %s18, 0
    %20 = vsyncpa [#allocation8], 0
    %s21 = scalar_lea.sflag [#allocation8], 1
    %22 = vsyncpa %s21, 0
    %23 = vsyncpa [#allocation11], 0
    %24 = vsyncpa [#allocation6], 0
    %s25 = scalar_lea.sflag [#allocation6], 1
    %26 = vsyncpa %s25, 0
    %27 = vsyncpa [#allocation14], 0
    %s28 = scalar_lea.sflag [#allocation14], 1
    %29 = vsyncpa %s28, 0
    loop: start=0, step=1, limit=4
    $region2: #{tpu_custom_call.1} parent=1 // loop_pre_header
      _
    $region3: #{tpu_custom_call.1} parent=1 // loop_header
      %s31 = sphi 0, %s35
      %p32 = scmp.ge.s32.totalorder %s31, 4
      %s38 = sphi 0, %s50
      %s39 = sphi 0, %s46
      %s40 = sphi 0, %s38
      %s41 = sphi 0, %s39
      %s42 = sphi 0, %s40
      %s43 = sphi 0, %s41
      %s55 = sphi 0, %s57
      %s58 = sphi 0, %s55
      %s59 = sphi 0, %s58
      %s75 = sphi 0, %s59
      %s81 = sphi 0, %s83
      %s84 = sphi 0, %s81
      %s85 = sphi 0, %s84
      %s101 = sphi 0, %s85
      %s105 = sphi 0, %s105
      %s107 = sphi 0, %s105
      %s108 = sphi 0, %s107
      %s122 = sphi 0, %s108
      %s126 = sphi 0, %s126
      %s128 = sphi 0, %s126
      %s129 = sphi 0, %s128
      %s143 = sphi 0, %s129
      %s147 = sphi 0, %s147
      %s149 = sphi 0, %s147
      %s150 = sphi 0, %s149
      %s164 = sphi 0, %s150
      %s168 = sphi 0, %s168
      %s170 = sphi 0, %s168
      %s171 = sphi 0, %s170
      %s185 = sphi 0, %s171
      %s189 = sphi 0, %s189
      %s191 = sphi 0, %s189
      %s192 = sphi 0, %s191
      %s206 = sphi 0, %s192
      %s210 = sphi 0, %s210
      %s212 = sphi 0, %s210
      %s213 = sphi 0, %s212
      %s227 = sphi 0, %s213
      %s231 = sphi 0, %s231
      %s233 = sphi 0, %s231
      %s234 = sphi 0, %s233
      %s248 = sphi 0, %s234
      %s252 = sphi 0, %s252
      %s254 = sphi 0, %s252
      %s255 = sphi 0, %s254
      %s269 = sphi 0, %s255
      %s275 = sphi 0, %s277
      %s278 = sphi 0, %s275
      %s279 = sphi 0, %s278
      %s295 = sphi 0, %s279
      %s303 = sphi 0, %s305
      %s306 = sphi 0, %s303
      %s307 = sphi 0, %s306
      %s323 = sphi 0, %s307
    $region4: #{tpu_custom_call.1} parent=1 // loop_header_branch
      %34 = sbr.rel (%p32) target = $region8
    $region5: #{tpu_custom_call.1} parent=1 // loop_body
      %s36 = ssub.s32 %s31, 1
      %s37 = ssub.s32 %s31, 2
      %s44 = sadd.s32 1, %s39
      %p45 = scmp.ge.s32.totalorder %s44, 1
      %s46 = scalar_select %p45, 0, %s44
      %s47 = sadd.s32 1, %s38
      %s48 = scalar_select %p45, %s47, %s38
      %p49 = scmp.ge.s32.totalorder %s48, 2
      %s50 = scalar_select %p49, 0, %s48
      %s51 = ssub.s32 %s38, %s50
      %s52 = ssub.s32 %s39, %s46
      %s53 = sor.u32 %s51, %s52
      %p54 = scmp.eq.s32.totalorder %s53, 0
      %s56 = sadd.s32 %s55, 1
      %s57 = scalar_select %p54, %s55, %s56
      %p60 = pneg %p54
      %p61 = scmp.eq.s32.totalorder %s31, 1
      %p62 = por %p60, %p61
      %p63 = scmp.ne.s32.totalorder %s55, %s58
      %p64 = scmp.eq.s32.totalorder %s31, 0
      %p65 = por %p63, %p64
      %p66 = scmp.ne.s32.totalorder %s55, %s58
      %p67 = scmp.eq.s32.totalorder %s36, 1
      %p68 = por %p66, %p67
      %p69 = scmp.ne.s32.totalorder %s58, %s59
      %p70 = scmp.eq.s32.totalorder %s36, 0
      %p71 = por %p69, %p70
      %p72 = scmp.ne.s32.totalorder %s58, %s59
      %p73 = scmp.eq.s32.totalorder %s37, 1
      %p74 = por %p72, %p73
      %p76 = scmp.ne.s32.totalorder %s59, %s75
      %p77 = scmp.eq.s32.totalorder %s37, 0
      %p78 = por %p76, %p77
      %s79 = ssub.s32 %s38, %s50
      %p80 = scmp.eq.s32.totalorder %s79, 0
      %s82 = sadd.s32 %s81, 1
      %s83 = scalar_select %p80, %s81, %s82
      %p86 = pneg %p80
      %p87 = scmp.eq.s32.totalorder %s31, 1
      %p88 = por %p86, %p87
      %p89 = scmp.ne.s32.totalorder %s81, %s84
      %p90 = scmp.eq.s32.totalorder %s31, 0
      %p91 = por %p89, %p90
      %p92 = scmp.ne.s32.totalorder %s81, %s84
      %p93 = scmp.eq.s32.totalorder %s36, 1
      %p94 = por %p92, %p93
      %p95 = scmp.ne.s32.totalorder %s84, %s85
      %p96 = scmp.eq.s32.totalorder %s36, 0
      %p97 = por %p95, %p96
      %p98 = scmp.ne.s32.totalorder %s84, %s85
      %p99 = scmp.eq.s32.totalorder %s37, 1
      %p100 = por %p98, %p99
      %p102 = scmp.ne.s32.totalorder %s85, %s101
      %p103 = scmp.eq.s32.totalorder %s37, 0
      %p104 = por %p102, %p103
      %s106 = sadd.s32 %s105, 1
      %p109 = scmp.eq.s32.totalorder %s31, 1
      %p110 = scmp.ne.s32.totalorder %s105, %s107
      %p111 = scmp.eq.s32.totalorder %s31, 0
      %p112 = por %p110, %p111
      %p113 = scmp.ne.s32.totalorder %s105, %s107
      %p114 = scmp.eq.s32.totalorder %s36, 1
      %p115 = por %p113, %p114
      %p116 = scmp.ne.s32.totalorder %s107, %s108
      %p117 = scmp.eq.s32.totalorder %s36, 0
      %p118 = por %p116, %p117
      %p119 = scmp.ne.s32.totalorder %s107, %s108
      %p120 = scmp.eq.s32.totalorder %s37, 1
      %p121 = por %p119, %p120
      %p123 = scmp.ne.s32.totalorder %s108, %s122
      %p124 = scmp.eq.s32.totalorder %s37, 0
      %p125 = por %p123, %p124
      %s127 = sadd.s32 %s126, 1
      %p130 = scmp.eq.s32.totalorder %s31, 1
      %p131 = scmp.ne.s32.totalorder %s126, %s128
      %p132 = scmp.eq.s32.totalorder %s31, 0
      %p133 = por %p131, %p132
      %p134 = scmp.ne.s32.totalorder %s126, %s128
      %p135 = scmp.eq.s32.totalorder %s36, 1
      %p136 = por %p134, %p135
      %p137 = scmp.ne.s32.totalorder %s128, %s129
      %p138 = scmp.eq.s32.totalorder %s36, 0
      %p139 = por %p137, %p138
      %p140 = scmp.ne.s32.totalorder %s128, %s129
      %p141 = scmp.eq.s32.totalorder %s37, 1
      %p142 = por %p140, %p141
      %p144 = scmp.ne.s32.totalorder %s129, %s143
      %p145 = scmp.eq.s32.totalorder %s37, 0
      %p146 = por %p144, %p145
      %s148 = sadd.s32 %s147, 1
      %p151 = scmp.eq.s32.totalorder %s31, 1
      %p152 = scmp.ne.s32.totalorder %s147, %s149
      %p153 = scmp.eq.s32.totalorder %s31, 0
      %p154 = por %p152, %p153
      %p155 = scmp.ne.s32.totalorder %s147, %s149
      %p156 = scmp.eq.s32.totalorder %s36, 1
      %p157 = por %p155, %p156
      %p158 = scmp.ne.s32.totalorder %s149, %s150
      %p159 = scmp.eq.s32.totalorder %s36, 0
      %p160 = por %p158, %p159
      %p161 = scmp.ne.s32.totalorder %s149, %s150
      %p162 = scmp.eq.s32.totalorder %s37, 1
      %p163 = por %p161, %p162
      %p165 = scmp.ne.s32.totalorder %s150, %s164
      %p166 = scmp.eq.s32.totalorder %s37, 0
      %p167 = por %p165, %p166
      %s169 = sadd.s32 %s168, 1
      %p172 = scmp.eq.s32.totalorder %s31, 1
      %p173 = scmp.ne.s32.totalorder %s168, %s170
      %p174 = scmp.eq.s32.totalorder %s31, 0
      %p175 = por %p173, %p174
      %p176 = scmp.ne.s32.totalorder %s168, %s170
      %p177 = scmp.eq.s32.totalorder %s36, 1
      %p178 = por %p176, %p177
      %p179 = scmp.ne.s32.totalorder %s170, %s171
      %p180 = scmp.eq.s32.totalorder %s36, 0
      %p181 = por %p179, %p180
      %p182 = scmp.ne.s32.totalorder %s170, %s171
      %p183 = scmp.eq.s32.totalorder %s37, 1
      %p184 = por %p182, %p183
      %p186 = scmp.ne.s32.totalorder %s171, %s185
      %p187 = scmp.eq.s32.totalorder %s37, 0
      %p188 = por %p186, %p187
      %s190 = sadd.s32 %s189, 1
      %p193 = scmp.eq.s32.totalorder %s31, 1
      %p194 = scmp.ne.s32.totalorder %s189, %s191
      %p195 = scmp.eq.s32.totalorder %s31, 0
      %p196 = por %p194, %p195
      %p197 = scmp.ne.s32.totalorder %s189, %s191
      %p198 = scmp.eq.s32.totalorder %s36, 1
      %p199 = por %p197, %p198
      %p200 = scmp.ne.s32.totalorder %s191, %s192
      %p201 = scmp.eq.s32.totalorder %s36, 0
      %p202 = por %p200, %p201
      %p203 = scmp.ne.s32.totalorder %s191, %s192
      %p204 = scmp.eq.s32.totalorder %s37, 1
      %p205 = por %p203, %p204
      %p207 = scmp.ne.s32.totalorder %s192, %s206
      %p208 = scmp.eq.s32.totalorder %s37, 0
      %p209 = por %p207, %p208
      %s211 = sadd.s32 %s210, 1
      %p214 = scmp.eq.s32.totalorder %s31, 1
      %p215 = scmp.ne.s32.totalorder %s210, %s212
      %p216 = scmp.eq.s32.totalorder %s31, 0
      %p217 = por %p215, %p216
      %p218 = scmp.ne.s32.totalorder %s210, %s212
      %p219 = scmp.eq.s32.totalorder %s36, 1
      %p220 = por %p218, %p219
      %p221 = scmp.ne.s32.totalorder %s212, %s213
      %p222 = scmp.eq.s32.totalorder %s36, 0
      %p223 = por %p221, %p222
      %p224 = scmp.ne.s32.totalorder %s212, %s213
      %p225 = scmp.eq.s32.totalorder %s37, 1
      %p226 = por %p224, %p225
      %p228 = scmp.ne.s32.totalorder %s213, %s227
      %p229 = scmp.eq.s32.totalorder %s37, 0
      %p230 = por %p228, %p229
      %s232 = sadd.s32 %s231, 1
      %p235 = scmp.eq.s32.totalorder %s31, 1
      %p236 = scmp.ne.s32.totalorder %s231, %s233
      %p237 = scmp.eq.s32.totalorder %s31, 0
      %p238 = por %p236, %p237
      %p239 = scmp.ne.s32.totalorder %s231, %s233
      %p240 = scmp.eq.s32.totalorder %s36, 1
      %p241 = por %p239, %p240
      %p242 = scmp.ne.s32.totalorder %s233, %s234
      %p243 = scmp.eq.s32.totalorder %s36, 0
      %p244 = por %p242, %p243
      %p245 = scmp.ne.s32.totalorder %s233, %s234
      %p246 = scmp.eq.s32.totalorder %s37, 1
      %p247 = por %p245, %p246
      %p249 = scmp.ne.s32.totalorder %s234, %s248
      %p250 = scmp.eq.s32.totalorder %s37, 0
      %p251 = por %p249, %p250
      %s253 = sadd.s32 %s252, 1
      %p256 = scmp.eq.s32.totalorder %s31, 1
      %p257 = scmp.ne.s32.totalorder %s252, %s254
      %p258 = scmp.eq.s32.totalorder %s31, 0
      %p259 = por %p257, %p258
      %p260 = scmp.ne.s32.totalorder %s252, %s254
      %p261 = scmp.eq.s32.totalorder %s36, 1
      %p262 = por %p260, %p261
      %p263 = scmp.ne.s32.totalorder %s254, %s255
      %p264 = scmp.eq.s32.totalorder %s36, 0
      %p265 = por %p263, %p264
      %p266 = scmp.ne.s32.totalorder %s254, %s255
      %p267 = scmp.eq.s32.totalorder %s37, 1
      %p268 = por %p266, %p267
      %p270 = scmp.ne.s32.totalorder %s255, %s269
      %p271 = scmp.eq.s32.totalorder %s37, 0
      %p272 = por %p270, %p271
      %s273 = ssub.s32 %s38, %s50
      %p274 = scmp.eq.s32.totalorder %s273, 0
      %s276 = sadd.s32 %s275, 1
      %s277 = scalar_select %p274, %s275, %s276
      %p280 = pneg %p274
      %p281 = scmp.eq.s32.totalorder %s31, 1
      %p282 = por %p280, %p281
      %p283 = scmp.ne.s32.totalorder %s275, %s278
      %p284 = scmp.eq.s32.totalorder %s31, 0
      %p285 = por %p283, %p284
      %p286 = scmp.ne.s32.totalorder %s275, %s278
      %p287 = scmp.eq.s32.totalorder %s36, 1
      %p288 = por %p286, %p287
      %p289 = scmp.ne.s32.totalorder %s278, %s279
      %p290 = scmp.eq.s32.totalorder %s36, 0
      %p291 = por %p289, %p290
      %p292 = scmp.ne.s32.totalorder %s278, %s279
      %p293 = scmp.eq.s32.totalorder %s37, 1
      %p294 = por %p292, %p293
      %p296 = scmp.ne.s32.totalorder %s279, %s295
      %p297 = scmp.eq.s32.totalorder %s37, 0
      %p298 = por %p296, %p297
      %s299 = ssub.s32 %s38, %s50
      %s300 = ssub.s32 %s39, %s46
      %s301 = sor.u32 %s299, %s300
      %p302 = scmp.eq.s32.totalorder %s301, 0
      %s304 = sadd.s32 %s303, 1
      %s305 = scalar_select %p302, %s303, %s304
      %p308 = pneg %p302
      %p309 = scmp.eq.s32.totalorder %s31, 1
      %p310 = por %p308, %p309
      %p311 = scmp.ne.s32.totalorder %s303, %s306
      %p312 = scmp.eq.s32.totalorder %s31, 0
      %p313 = por %p311, %p312
      %p314 = scmp.ne.s32.totalorder %s303, %s306
      %p315 = scmp.eq.s32.totalorder %s36, 1
      %p316 = por %p314, %p315
      %p317 = scmp.ne.s32.totalorder %s306, %s307
      %p318 = scmp.eq.s32.totalorder %s36, 0
      %p319 = por %p317, %p318
      %p320 = scmp.ne.s32.totalorder %s306, %s307
      %p321 = scmp.eq.s32.totalorder %s37, 1
      %p322 = por %p320, %p321
      %p324 = scmp.ne.s32.totalorder %s307, %s323
      %p325 = scmp.eq.s32.totalorder %s37, 0
      %p326 = por %p324, %p325
      %p327 = scmp.le.s32.totalorder 1, %s31
      %p328 = scmp.lt.s32.totalorder %s31, 3
      %p329 = pnand %p327, %p328
      %p330 = pneg %p329
      // Predicated region
      $region9: #{tpu_custom_call.1} parent=5 // pred_check
        _
      $region10: #{tpu_custom_call.1} parent=5 // pred_check_branch
        %332 = sbr.rel (%p329) target = $region12
      $region11: #{tpu_custom_call.1} parent=5 // pred_region
        %s333 = ssub.s32 %s31, 1
        // Predicated region
        $region13: #{tpu_custom_call.1} parent=11 // pred_check
          %p334 = pneg %p118
        $region14: #{tpu_custom_call.1} parent=11 // pred_check_branch
          %336 = sbr.rel (%p334) target = $region16
        $region15: #{tpu_custom_call.1} parent=11 // pred_region
          %338 = vsyncadd [#allocation8], 0
          %s339 = sshll.u32 %s2, 4
          %s340 = int_to_ptr.hbm [resolvable:$true] %s339
          %s341 = sshll.u32 [#allocation9], 4
          %s342 = int_to_ptr.vmem [resolvable:$true] %s341
          %347 = dma.hbm_to_vmem [thread:$0]  %s340, 512, %s342, [#allocation8], 128, 128, 8
        $region16: #{tpu_custom_call.1} parent=11 // pred_fallthru
          _
        // Predicated region
        $region17: #{tpu_custom_call.1} parent=11 // pred_check
          %p348 = pneg %p139
        $region18: #{tpu_custom_call.1} parent=11 // pred_check_branch
          %350 = sbr.rel (%p348) target = $region20
        $region19: #{tpu_custom_call.1} parent=11 // pred_region
          _
        $region20: #{tpu_custom_call.1} parent=11 // pred_fallthru
          _
        // Predicated region
        $region21: #{tpu_custom_call.1} parent=11 // pred_check
          %p351 = pneg %p160
        $region22: #{tpu_custom_call.1} parent=11 // pred_check_branch
          %353 = sbr.rel (%p351) target = $region24
        $region23: #{tpu_custom_call.1} parent=11 // pred_region
          _
        $region24: #{tpu_custom_call.1} parent=11 // pred_fallthru
          _
        // Predicated region
        $region25: #{tpu_custom_call.1} parent=11 // pred_check
          %p354 = pneg %p181
        $region26: #{tpu_custom_call.1} parent=11 // pred_check_branch
          %356 = sbr.rel (%p354) target = $region28
        $region27: #{tpu_custom_call.1} parent=11 // pred_region
          _
        $region28: #{tpu_custom_call.1} parent=11 // pred_fallthru
          _
        // Predicated region
        $region29: #{tpu_custom_call.1} parent=11 // pred_check
          %p357 = pneg %p202
        $region30: #{tpu_custom_call.1} parent=11 // pred_check_branch
          %359 = sbr.rel (%p357) target = $region32
        $region31: #{tpu_custom_call.1} parent=11 // pred_region
          %361 = vsyncadd [#allocation11], 0
          %s362 = sshll.u32 %s6, 4
          %s363 = int_to_ptr.hbm [resolvable:$true] %s362
          %s364 = sshll.u32 [#allocation10], 4
          %s365 = int_to_ptr.vmem [resolvable:$true] %s364
          %370 = dma.hbm_to_vmem [thread:$0]  %s363, 512, %s365, [#allocation11], 128, 128, 8
        $region32: #{tpu_custom_call.1} parent=11 // pred_fallthru
          _
        // Predicated region
        $region33: #{tpu_custom_call.1} parent=11 // pred_check
          %p371 = pneg %p223
        $region34: #{tpu_custom_call.1} parent=11 // pred_check_branch
          %373 = sbr.rel (%p371) target = $region36
        $region35: #{tpu_custom_call.1} parent=11 // pred_region
          _
        $region36: #{tpu_custom_call.1} parent=11 // pred_fallthru
          _
        // Predicated region
        $region37: #{tpu_custom_call.1} parent=11 // pred_check
          %p374 = pneg %p244
        $region38: #{tpu_custom_call.1} parent=11 // pred_check_branch
          %376 = sbr.rel (%p374) target = $region40
        $region39: #{tpu_custom_call.1} parent=11 // pred_region
          _
        $region40: #{tpu_custom_call.1} parent=11 // pred_fallthru
          _
        // Predicated region
        $region41: #{tpu_custom_call.1} parent=11 // pred_check
          %p377 = pneg %p265
        $region42: #{tpu_custom_call.1} parent=11 // pred_check_branch
          %379 = sbr.rel (%p377) target = $region44
        $region43: #{tpu_custom_call.1} parent=11 // pred_region
          _
        $region44: #{tpu_custom_call.1} parent=11 // pred_fallthru
          _
      $region12: #{tpu_custom_call.1} parent=5 // pred_fallthru
        _
      %p380 = scmp.lt.s32.totalorder %s31, 2
      // Predicated region
      $region45: #{tpu_custom_call.1} parent=5 // pred_check
        %p381 = pneg %p380
      $region46: #{tpu_custom_call.1} parent=5 // pred_check_branch
        %383 = sbr.rel (%p381) target = $region48
      $region47: #{tpu_custom_call.1} parent=5 // pred_region
        // Predicated region
        $region49: #{tpu_custom_call.1} parent=47 // pred_check
          %p384 = pneg %p65
        $region50: #{tpu_custom_call.1} parent=47 // pred_check_branch
          %386 = sbr.rel (%p384) target = $region52
        $region51: #{tpu_custom_call.1} parent=47 // pred_region
          %s387 = sand.u32 %s55, 1
          %s388 = scalar_lea.sflag [#allocation5], %s387
          %s389 = sand.u32 %s55, 1
          %s390 = smul.addr %s389, 8
          %s391 = scalar_lea.vmem [#allocation4], %s390
          %393 = vsyncadd %s388, 0
          %s394 = sadd.s32 %s39, %s38
          %s395 = smul.addr %s394, 8
          %s396 = scalar_lea.hbm %s0, %s395
          %s398 = sshll.u32 %s396, 4
          %s399 = int_to_ptr.hbm [resolvable:$true] %s398
          %s400 = sshll.u32 %s391, 4
          %s401 = int_to_ptr.vmem [resolvable:$true] %s400
          %403 = dma.hbm_to_vmem [thread:$0]  %s399, 128, %s401, %s388
        $region52: #{tpu_custom_call.1} parent=47 // pred_fallthru
          _
        // Predicated region
        $region53: #{tpu_custom_call.1} parent=47 // pred_check
          %p404 = pneg %p91
        $region54: #{tpu_custom_call.1} parent=47 // pred_check_branch
          %406 = sbr.rel (%p404) target = $region56
        $region55: #{tpu_custom_call.1} parent=47 // pred_region
          %s407 = sand.u32 %s31, 1
          %s408 = scalar_lea.sflag [#allocation8], %s407
          %s409 = sand.u32 %s81, 1
          %s410 = smul.addr %s409, 8
          %s411 = scalar_lea.vmem [#allocation7], %s410
          %413 = vsyncadd %s408, 0
          %s414 = smul.addr %s38, 8
          %s415 = scalar_lea.hbm %s1, %s414
          %s417 = sshll.u32 %s415, 4
          %s418 = int_to_ptr.hbm [resolvable:$true] %s417
          %s419 = sshll.u32 %s411, 4
          %s420 = int_to_ptr.vmem [resolvable:$true] %s419
          %422 = dma.hbm_to_vmem [thread:$0]  %s418, 128, %s420, %s408
        $region56: #{tpu_custom_call.1} parent=47 // pred_fallthru
          _
      $region48: #{tpu_custom_call.1} parent=5 // pred_fallthru
        _
      %p423 = scmp.le.s32.totalorder 1, %s31
      %p424 = scmp.lt.s32.totalorder %s31, 3
      %p425 = pnand %p423, %p424
      %p426 = pneg %p425
      // Predicated region
      $region57: #{tpu_custom_call.1} parent=5 // pred_check
        _
      $region58: #{tpu_custom_call.1} parent=5 // pred_check_branch
        %428 = sbr.rel (%p425) target = $region60
      $region59: #{tpu_custom_call.1} parent=5 // pred_region
        %s429 = ssub.s32 %s31, 1
        %s430 = sand.u32 %s58, 1
        %s431 = scalar_lea.sflag [#allocation5], %s430
        %s432 = sand.u32 %s58, 1
        %s433 = smul.addr %s432, 8
        %s434 = scalar_lea.vmem [#allocation4], %s433
        // Predicated region
        $region61: #{tpu_custom_call.1} parent=59 // pred_check
          %p435 = pneg %p71
        $region62: #{tpu_custom_call.1} parent=59 // pred_check_branch
          %437 = sbr.rel (%p435) target = $region64
        $region63: #{tpu_custom_call.1} parent=59 // pred_region
          %439 = dma.done %s431, 128
        $region64: #{tpu_custom_call.1} parent=59 // pred_fallthru
          _
        %s440 = sand.u32 %s36, 1
        %s441 = scalar_lea.sflag [#allocation8], %s440
        %s442 = sand.u32 %s84, 1
        %s443 = smul.addr %s442, 8
        %s444 = scalar_lea.vmem [#allocation7], %s443
        // Predicated region
        $region65: #{tpu_custom_call.1} parent=59 // pred_check
          %p445 = pneg %p97
        $region66: #{tpu_custom_call.1} parent=59 // pred_check_branch
          %447 = sbr.rel (%p445) target = $region68
        $region67: #{tpu_custom_call.1} parent=59 // pred_region
          %449 = dma.done %s441, 128
        $region68: #{tpu_custom_call.1} parent=59 // pred_fallthru
          _
        // Predicated region
        $region69: #{tpu_custom_call.1} parent=59 // pred_check
          %p450 = pneg %p118
        $region70: #{tpu_custom_call.1} parent=59 // pred_check_branch
          %452 = sbr.rel (%p450) target = $region72
        $region71: #{tpu_custom_call.1} parent=59 // pred_region
          %454 = dma.done [#allocation8], 512
        $region72: #{tpu_custom_call.1} parent=59 // pred_fallthru
          _
        // Predicated region
        $region73: #{tpu_custom_call.1} parent=59 // pred_check
          %p455 = pneg %p202
        $region74: #{tpu_custom_call.1} parent=59 // pred_check_branch
          %457 = sbr.rel (%p455) target = $region76
        $region75: #{tpu_custom_call.1} parent=59 // pred_region
          %459 = dma.done [#allocation11], 512
        $region76: #{tpu_custom_call.1} parent=59 // pred_fallthru
          _
        %s460 = sand.u32 %s58, 1
        %s461 = scalar_lea.sflag [#allocation5], %s460
        %s462 = sand.u32 %s58, 1
        %s463 = smul.addr %s462, 8
        %s464 = scalar_lea.vmem [#allocation4], %s463
        %p465 = pneg %p71
        %p466 = pneg %p68
        %s467 = sand.u32 %s36, 1
        %s468 = scalar_lea.sflag [#allocation8], %s467
        %s469 = sand.u32 %s84, 1
        %s470 = smul.addr %s469, 8
        %s471 = scalar_lea.vmem [#allocation7], %s470
        %p472 = pneg %p97
        %p473 = pneg %p94
        %p474 = pneg %p118
        %p475 = pneg %p115
        %p476 = pneg %p139
        %p477 = pneg %p136
        %p478 = pneg %p160
        %p479 = pneg %p157
        %p480 = pneg %p181
        %p481 = pneg %p178
        %p482 = pneg %p202
        %p483 = pneg %p199
        %p484 = pneg %p223
        %p485 = pneg %p220
        %p486 = pneg %p244
        %p487 = pneg %p241
        %p488 = pneg %p265
        %p489 = pneg %p262
        %p490 = pneg %p291
        %p491 = pneg %p288
        %s492 = sand.u32 %s278, 1
        %s493 = scalar_lea.sflag [#allocation6], %s492
        %s494 = sand.u32 %s278, 1
        %s495 = smul.addr %s494, 8
        %s496 = scalar_lea.vmem [#allocation12], %s495
        %p497 = pneg %p319
        %p498 = pneg %p316
        %s499 = sand.u32 %s306, 1
        %s500 = scalar_lea.sflag [#allocation14], %s499
        %s501 = sand.u32 %s306, 1
        %s502 = smul.addr %s501, 8
        %s503 = scalar_lea.vmem [#allocation13], %s502
        %p504 = scmp.eq.s32.totalorder %s41, 0
        // Predicated region
        $region77: #{tpu_custom_call.1} parent=59 // pred_check
          %p505 = pneg %p504
        $region78: #{tpu_custom_call.1} parent=59 // pred_check_branch
          %507 = sbr.rel (%p505) target = $region80
        $region79: #{tpu_custom_call.1} parent=59 // pred_region
          %v508 = vld [vmem:[%s444] sm:$0xff]
          %v509 = vld [vmem:[#allocation10] sm:$0xff]
          %v510 = vld [vmem:[#allocation10 + $0x8] sm:$0xff]
          %v511 = vld [vmem:[#allocation10 + $0x10] sm:$0xff]
          %v512 = vld [vmem:[#allocation10 + $0x18] sm:$0xff]
          %v513 = vld [vmem:[%s7] sm:$0x1]
          %v515 = vperm.slane %v513, 0
          %vm517 = vcmask 261120
          %v519 = vsel %vm517, %v508, 0
          %521 = vmatpush.msra.mxu0 0.0
          %522 = vmatpush.msra.mxu0 0.0
          %523 = vmatpush.msra.mxu0 0.0
          %524 = vmatpush.msra.mxu0 0.0
          %525 = vmatpush.msra.mxu0 0.0
          %526 = vmatpush.msra.mxu0 0.0
          %527 = vmatpush.msra.mxu0 0.0
          %528 = vmatpush.msra.mxu0 0.0
          %529 = vmatpush.msra.mxu0 0.0
          %530 = vmatpush.msra.mxu0 0.0
          %531 = vmatpush.msra.mxu0 0.0
          %532 = vmatpush.msra.mxu0 0.0
          %533 = vmatpush.msra.mxu0 %v512
          %534 = vmatpush.msra.mxu0 %v511
          %535 = vmatpush.msra.mxu0 %v510
          %536 = vmatpush.msra.mxu0 %v509
          %537 = vmatmul.f32.gmra.mxu0 %v519
          %v538 = vpop.f32.mrf.mxu0
          %v539 = vadd.f32 %v515, %v538
          %540 = vdwg.mxu0
          %v541 = vmax.f32 %v539, 0.0
          %v542 = vld [vmem:[%s8] sm:$0x1]
          %v544 = vperm.slane %v542, 0
          %v546 = vmul.f32 %v541, %v544
          %v547 = vld [vmem:[%s9] sm:$0x1]
          %v549 = vperm.slane %v547, 0
          %v551 = vadd.f32 %v546, %v549
          %vm552 = vcmask 523264
          %553 = vst.msk [vmem:[#allocation3] sm:$0xff] %vm552, %v551
          %vm554 = vcmask 64512
          %555 = vst.msk [vmem:[#allocation2] sm:$0xff] %vm554, 0.0
        $region80: #{tpu_custom_call.1} parent=59 // pred_fallthru
          _
        %v556 = vld [vmem:[%s434] sm:$0xff]
        %v557 = vld [vmem:[#allocation9] sm:$0xff]
        %v558 = vld [vmem:[#allocation9 + $0x8] sm:$0xff]
        %v559 = vld [vmem:[#allocation9 + $0x10] sm:$0xff]
        %v560 = vld [vmem:[#allocation9 + $0x18] sm:$0xff]
        %v561 = vld [vmem:[%s3] sm:$0x1]
        %v563 = vperm.slane %v561, 0
        %vm565 = vcmask 261120
        %v567 = vsel %vm565, %v556, 0
        %569 = vmatpush.msra.mxu0 0.0
        %570 = vmatpush.msra.mxu0 0.0
        %571 = vmatpush.msra.mxu0 0.0
        %572 = vmatpush.msra.mxu0 0.0
        %573 = vmatpush.msra.mxu0 0.0
        %574 = vmatpush.msra.mxu0 0.0
        %575 = vmatpush.msra.mxu0 0.0
        %576 = vmatpush.msra.mxu0 0.0
        %577 = vmatpush.msra.mxu0 0.0
        %578 = vmatpush.msra.mxu0 0.0
        %579 = vmatpush.msra.mxu0 0.0
        %580 = vmatpush.msra.mxu0 0.0
        %581 = vmatpush.msra.mxu0 %v560
        %582 = vmatpush.msra.mxu0 %v559
        %583 = vmatpush.msra.mxu0 %v558
        %584 = vmatpush.msra.mxu0 %v557
        %585 = vmatmul.f32.gmra.mxu0 %v567
        %v586 = vpop.f32.mrf.mxu0
        %v587 = vadd.f32 %v563, %v586
        %588 = vdwg.mxu0
        %v589 = vmax.f32 %v587, 0.0
        %v590 = vld [vmem:[%s4] sm:$0x1]
        %v592 = vperm.slane %v590, 0
        %v594 = vmul.f32 %v589, %v592
        %v595 = vld [vmem:[%s5] sm:$0x1]
        %v597 = vperm.slane %v595, 0
        %v599 = vadd.f32 %v594, %v597
        %v600 = vld [vmem:[#allocation3] sm:$0xff]
        %vm601 = vcmask 523264
        %v603 = vsel %vm601, %v600, 0
        %v606 = vsel %vm601, %v599, 0
        %608 = vmatpush.xpose.msra.mxu0 0.0
        %609 = vmatpush.xpose.msra.mxu0 0.0
        %610 = vmatpush.xpose.msra.mxu0 0.0
        %611 = vmatpush.xpose.msra.mxu0 0.0
        %612 = vmatpush.xpose.msra.mxu0 0.0
        %613 = vmatpush.xpose.msra.mxu0 0.0
        %614 = vmatpush.xpose.msra.mxu0 0.0
        %615 = vmatpush.xpose.msra.mxu0 0.0
        %616 = vmatpush.xpose.msra.mxu0 0.0
        %617 = vmatpush.xpose.msra.mxu0 0.0
        %618 = vmatpush.xpose.msra.mxu0 0.0
        %619 = vmatpush.xpose.msra.mxu0 0.0
        %620 = vmatpush.xpose.msra.mxu0 0.0
        %621 = vmatpush.xpose.msra.mxu0 0.0
        %622 = vmatpush.xpose.msra.mxu0 0.0
        %623 = vmatpush.xpose.msra.mxu0 %v606
        %624 = vmatmul.f32.gmra.mxu0 %v603
        %v625 = vpop.f32.mrf.mxu0
        %v626 = vadd.f32 0.0, %v625
        %627 = vdwg.mxu0
        %vm628 = vcmask 64512
        %629 = vst.msk [vmem:[%s503] sm:$0xff] %vm628, %v626
        %v630 = vsel %vm628, %v626, -inf
        %v631 = vrot.slane %v630, 4
        %v632 = vmax.f32 %v630, %v631
        %v633 = vrot.slane %v632, 2
        %v634 = vmax.f32 %v632, %v633
        %v635 = vrot.slane %v634, 1
        %v636 = vmax.f32 %v634, %v635
        %v637 = vsub.f32 %v626, %v636
        %v638 = vmul.f32 %v637, 1.442695
        %v639 = vpow.pop %v638
        %v640 = vsel %vm628, %v639, 0.0
        %v641 = vrot.slane %v640, 4
        %v642 = vadd.f32 %v640, %v641
        %v643 = vrot.slane %v642, 2
        %v644 = vadd.f32 %v642, %v643
        %v645 = vrot.slane %v644, 1
        %v646 = vadd.f32 %v644, %v645
        %v647 = vrcp.pop %v646
        %v648 = vmul.f32 %v646, %v647
        %v649 = vsub.f32 1.0, %v648
        %v650 = vmul.f32 %v647, %v649
        %v651 = vadd.f32 %v647, %v650
        %vm652 = vweird.f32 %v646
        %vm653 = vweird.f32 %v647
        %vm654 = vmor %vm652, %vm653
        %v655 = vsel %vm654, %v647, %v651
        %v656 = vand.u32 2147483647, %v646
        %vm657 = vcmp.eq.f32.partialorder %v656, 8.507059e+37
        %v658 = vand.u32 %v646, 2147483648
        %v659 = vor.u32 1.1754944e-38, %v658
        %v660 = vsel %vm657, %v659, %v655
        %v661 = vmul.f32 %v639, %v660
        %v662 = vld [vmem:[#allocation2] sm:$0xff]
        %v663 = vmax.f32 %v662, %v661
        %664 = vst.msk [vmem:[#allocation2] sm:$0xff] %vm628, %v663
        // Predicated region
        $region81: #{tpu_custom_call.1} parent=59 // pred_check
          %p665 = pneg %p504
        $region82: #{tpu_custom_call.1} parent=59 // pred_check_branch
          %667 = sbr.rel (%p665) target = $region84
        $region83: #{tpu_custom_call.1} parent=59 // pred_region
          %v668 = vld [vmem:[#allocation2] sm:$0xff]
          %v669 = vsel %vm628, %v668, -inf
          %670 = vmax.xlane.f32.xlu0 %v669
          %v671 = vpop.xlane.xlu0 %670
          %v672 = vld [vmem:[%s444] sm:$0xff]
          %v673 = vadd.f32 %v671, 1.0
          %v674 = vmul.f32 %v673, %v672
          %675 = vst.msk [vmem:[%s496] sm:$0xff] %vm565, %v674
        $region84: #{tpu_custom_call.1} parent=59 // pred_fallthru
          _
        %s676 = sand.u32 %s278, 1
        %s677 = scalar_lea.sflag [#allocation6], %s676
        %s678 = sand.u32 %s278, 1
        %s679 = smul.addr %s678, 8
        %s680 = scalar_lea.vmem [#allocation12], %s679
        %s681 = sand.u32 %s306, 1
        %s682 = scalar_lea.sflag [#allocation14], %s681
        %s683 = sand.u32 %s306, 1
        %s684 = smul.addr %s683, 8
        %s685 = scalar_lea.vmem [#allocation13], %s684
        // Predicated region
        $region85: #{tpu_custom_call.1} parent=59 // pred_check
          %p686 = pneg %p288
        $region86: #{tpu_custom_call.1} parent=59 // pred_check_branch
          %688 = sbr.rel (%p686) target = $region88
        $region87: #{tpu_custom_call.1} parent=59 // pred_region
          %690 = vsyncadd %s677, 0
          %s691 = smul.addr %s40, 8
          %s692 = scalar_lea.hbm %s10, %s691
          %s694 = sshll.u32 %s680, 4
          %s695 = int_to_ptr.vmem [resolvable:$true] %s694
          %s696 = sshll.u32 %s692, 4
          %s697 = int_to_ptr.hbm [resolvable:$true] %s696
          %699 = dma.vmem_to_hbm [thread:$0]  %s695, 128, %s697, %s677
        $region88: #{tpu_custom_call.1} parent=59 // pred_fallthru
          _
        // Predicated region
        $region89: #{tpu_custom_call.1} parent=59 // pred_check
          %p700 = pneg %p316
        $region90: #{tpu_custom_call.1} parent=59 // pred_check_branch
          %702 = sbr.rel (%p700) target = $region92
        $region91: #{tpu_custom_call.1} parent=59 // pred_region
          %704 = vsyncadd %s682, 0
          %s705 = sadd.s32 %s41, %s40
          %s706 = smul.addr %s705, 8
          %s707 = scalar_lea.hbm %s11, %s706
          %s709 = sshll.u32 %s685, 4
          %s710 = int_to_ptr.vmem [resolvable:$true] %s709
          %s711 = sshll.u32 %s707, 4
          %s712 = int_to_ptr.hbm [resolvable:$true] %s711
          %714 = dma.vmem_to_hbm [thread:$0]  %s710, 128, %s712, %s682
        $region92: #{tpu_custom_call.1} parent=59 // pred_fallthru
          _
      $region60: #{tpu_custom_call.1} parent=5 // pred_fallthru
        _
      %p715 = scmp.le.s32.totalorder 2, %s31
      // Predicated region
      $region93: #{tpu_custom_call.1} parent=5 // pred_check
        %p716 = pneg %p715
      $region94: #{tpu_custom_call.1} parent=5 // pred_check_branch
        %718 = sbr.rel (%p716) target = $region96
      $region95: #{tpu_custom_call.1} parent=5 // pred_region
        %s719 = ssub.s32 %s31, 2
        // Predicated region
        $region97: #{tpu_custom_call.1} parent=95 // pred_check
          %p720 = pneg %p294
        $region98: #{tpu_custom_call.1} parent=95 // pred_check_branch
          %722 = sbr.rel (%p720) target = $region100
        $region99: #{tpu_custom_call.1} parent=95 // pred_region
          %s723 = sand.u32 %s279, 1
          %s724 = scalar_lea.sflag [#allocation6], %s723
          %s725 = sand.u32 %s279, 1
          %s726 = smul.addr %s725, 8
          %s727 = scalar_lea.vmem [#allocation12], %s726
          %729 = dma.done %s724, 128
        $region100: #{tpu_custom_call.1} parent=95 // pred_fallthru
          _
        // Predicated region
        $region101: #{tpu_custom_call.1} parent=95 // pred_check
          %p730 = pneg %p322
        $region102: #{tpu_custom_call.1} parent=95 // pred_check_branch
          %732 = sbr.rel (%p730) target = $region104
        $region103: #{tpu_custom_call.1} parent=95 // pred_region
          %s733 = sand.u32 %s307, 1
          %s734 = scalar_lea.sflag [#allocation14], %s733
          %s735 = sand.u32 %s307, 1
          %s736 = smul.addr %s735, 8
          %s737 = scalar_lea.vmem [#allocation13], %s736
          %739 = dma.done %s734, 128
        $region104: #{tpu_custom_call.1} parent=95 // pred_fallthru
          _
      $region96: #{tpu_custom_call.1} parent=5 // pred_fallthru
        _
    $region6: #{tpu_custom_call.1} parent=1 // loop_footer
      %s35 = sadd.s32 1, %s31
    $region7: #{tpu_custom_call.1} parent=1 // loop_footer_branch
      %30 = sbr.rel target = $region3
    $region8: #{tpu_custom_call.1} parent=1 // loop_exit
      _
    %740 = vsyncpa [#allocation5], 1
    %s741 = scalar_lea.sflag [#allocation5], 1
    %742 = vsyncpa %s741, 1
    %743 = vsyncpa [#allocation8], 1
    %s744 = scalar_lea.sflag [#allocation8], 1
    %745 = vsyncpa %s744, 1
    %746 = vsyncpa [#allocation11], 1
    %747 = vsyncpa [#allocation6], 1
    %s748 = scalar_lea.sflag [#allocation6], 1
    %749 = vsyncpa %s748, 1
    %750 = vsyncpa [#allocation14], 1
    %s751 = scalar_lea.sflag [#allocation14], 1
    %752 = vsyncpa %s751, 1

</llo_original>
